<compile_context>
chip_gen: v7x
topology: tpu7x:2x2x1
jax: 0.10.0
libtpu: 0.0.40
codegen_flags: <defaults>
</compile_context>

<pallas_src>
import jax
import jax.numpy as jnp
from jax.experimental import pallas as pl
from jax.experimental.pallas import tpu as pltpu

IN_F = 784
OUT_F = 10
OUT_F_PAD = 128     # lane-dense logits slab; sliced back to 10 in the wrapper
DIMS = [IN_F, 512, 256, 128, 64, 32, OUT_F]


def _round_up(n, m):
    return (n + m - 1) // m * m


def _mlp_kernel(x_ref,
                w1_ref, b1_ref,
                w2_ref, b2_ref,
                w3_ref, b3_ref,
                w4_ref, b4_ref,
                w5_ref, b5_ref,
                w6_ref, b6_ref,
                o_ref):
    # x_ref: (TB, 784) f32.  weights: bf16 [in, out].  biases: f32 (1, out).
    # o_ref: (TB, 128) bf16 (lane-dense padded logits).
    def layer(h, w_ref, b_ref, relu):
        # bf16 operands into the MXU, f32 accumulation; bias + ReLU on the f32
        # accumulator (v5e's VPU has no bf16 elementwise math).
        y = jnp.dot(h, w_ref[...], preferred_element_type=jnp.float32)
        y = y + b_ref[...]                 # (1, N) implicit broadcast, f32 epilogue
        if relu:
            # Keep inter-layer activations bf16: halves VMEM footprint and
            # load/store slot traffic for the (TB, 512)/(TB, 256) intermediates.
            return jnp.maximum(y, 0.0).astype(jnp.bfloat16)
        return y

    h = x_ref[...].astype(jnp.bfloat16)    # bf16 cast inside the kernel
    h = layer(h, w1_ref, b1_ref, relu=True)
    h = layer(h, w2_ref, b2_ref, relu=True)
    h = layer(h, w3_ref, b3_ref, relu=True)
    h = layer(h, w4_ref, b4_ref, relu=True)
    h = layer(h, w5_ref, b5_ref, relu=True)
    o_ref[...] = layer(h, w6_ref, b6_ref, relu=False).astype(o_ref.dtype)


def mlp_forward(x, params, *, tb=1024):
    """x: (B, 784) f32. params: 6 pairs of (w [in, out], b [1, out]), f32."""
    B = x.shape[0]

    # Batch tile: multiple of 16 (bf16 sublane packing).  Cap the tile at half
    # the (aligned) batch so the grid has >= 2 steps whenever the batch allows
    # it — required for megacore / v7x 2-TC sharding of the "parallel" axis.
    b_aligned = _round_up(max(B, 16), 16)
    tb_cap = max(16, _round_up(-(-b_aligned // 2), 16))
    tb_eff = min(tb, tb_cap)
    b_pad = _round_up(B, tb_eff)

    # No pad+cast pre-pass: feed x as-is (f32, K=784).  Only a batch-dim zero
    # pad remains, and only when B is not a multiple of the tile.
    x_in = x if b_pad == B else jnp.pad(x, ((0, b_pad - B), (0, 0)))

    # Pack weights: bf16 [in, out]; pad layer-6 cols/bias 10 -> 128 for a
    # lane-dense output store (padded columns are exact zeros, sliced off).
    flat = []
    for li, (w, b) in enumerate(params):
        w = w.astype(jnp.bfloat16)
        b = b.astype(jnp.float32)
        if li == len(params) - 1:
            w = jnp.pad(w, ((0, 0), (0, OUT_F_PAD - OUT_F)))
            b = jnp.pad(b, ((0, 0), (0, OUT_F_PAD - OUT_F)))
        flat += [w, b]

    grid = (b_pad // tb_eff,)
    # Weights/biases: same block every iteration -> DMA'd once, VMEM-resident.
    resident = lambda a: pl.BlockSpec(a.shape, lambda i: (0, 0))

    weight_bytes = sum(int(p.size) * p.dtype.itemsize for p in flat)
    flops = 2 * b_pad * sum(DIMS[l] * DIMS[l + 1] for l in range(len(DIMS) - 1))
    bytes_accessed = (weight_bytes
                      + b_pad * IN_F * 4          # f32 input read
                      + b_pad * OUT_F_PAD * 2)    # bf16 padded-logits write

    out = pl.pallas_call(
        _mlp_kernel,
        out_shape=jax.ShapeDtypeStruct((b_pad, OUT_F_PAD), jnp.bfloat16),
        grid_spec=pltpu.PrefetchScalarGridSpec(
            num_scalar_prefetch=0,
            grid=grid,
            in_specs=[pl.BlockSpec((tb_eff, IN_F), lambda i: (i, 0))]
                     + [resident(p) for p in flat],
            out_specs=pl.BlockSpec((tb_eff, OUT_F_PAD), lambda i: (i, 0)),
        ),
        compiler_params=pltpu.CompilerParams(
            dimension_semantics=("parallel",),
            vmem_limit_bytes=28 << 20,   # fits v7x's 64 MiB physical VMEM
        ),
        cost_estimate=pl.CostEstimate(
            flops=flops, transcendentals=0, bytes_accessed=bytes_accessed),
    )(x_in, *flat)

    return out[:B, :OUT_F].astype(jnp.float32)


def init_params(key):
    """Deterministic init matching nn.Linear default (uniform +/- 1/sqrt(fan_in))."""
    params = []
    for i in range(len(DIMS) - 1):
        fan_in, fan_out = DIMS[i], DIMS[i + 1]
        key, kw, kb = jax.random.split(key, 3)
        bound = 1.0 / jnp.sqrt(fan_in)
        # Stored as [in, out] (transposed relative to PyTorch's [out, in]).
        w = jax.random.uniform(kw, (fan_in, fan_out), jnp.float32, -bound, bound)
        b = jax.random.uniform(kb, (1, fan_out), jnp.float32, -bound, bound)
        params.append((w, b))
    return params


def reference_forward(x, params):
    h = x
    for i, (w, b) in enumerate(params):
        h = h @ w + b
        if i < len(params) - 1:
            h = jnp.maximum(h, 0.0)
    return h


if __name__ == "__main__":
    key = jax.random.PRNGKey(0)
    kx, kp = jax.random.split(key)

    B = 8
    # Input shaped like MNIST NCHW, then flattened exactly like x.view(-1, 784).
    x_nchw = jax.random.normal(kx, (B, 1, 28, 28), dtype=jnp.float32)
    x = x_nchw.reshape(-1, 784)

    params = init_params(kp)

    out = mlp_forward(x, params)
    out = jax.block_until_ready(out)

    ref = reference_forward(x, params)   # pure f32 reference
    assert out.shape == (B, 10), out.shape
    # bf16 weights/activations into the MXU (f32 accumulation) + bf16 logits
    # writeback -> loosened tolerance vs the pure-f32 reference.
    assert jnp.allclose(out, ref, atol=5e-2, rtol=5e-2), \
        float(jnp.max(jnp.abs(out - ref)))

    print("KERNEL_OK")
</pallas_src>

<mosaic_0001>
module attributes {stable_mosaic.version = 11 : i64} {
  func.func @_mlp_kernel(%arg0: i32, %arg1: memref<16x784xf32, #tpu.memory_space<vmem>>, %arg2: memref<784x512xbf16, #tpu.memory_space<vmem>>, %arg3: memref<1x512xf32, #tpu.memory_space<vmem>>, %arg4: memref<512x256xbf16, #tpu.memory_space<vmem>>, %arg5: memref<1x256xf32, #tpu.memory_space<vmem>>, %arg6: memref<256x128xbf16, #tpu.memory_space<vmem>>, %arg7: memref<1x128xf32, #tpu.memory_space<vmem>>, %arg8: memref<128x64xbf16, #tpu.memory_space<vmem>>, %arg9: memref<1x64xf32, #tpu.memory_space<vmem>>, %arg10: memref<64x32xbf16, #tpu.memory_space<vmem>>, %arg11: memref<1x32xf32, #tpu.memory_space<vmem>>, %arg12: memref<32x128xbf16, #tpu.memory_space<vmem>>, %arg13: memref<1x128xf32, #tpu.memory_space<vmem>>, %arg14: memref<16x128xbf16, #tpu.memory_space<vmem>>) attributes {dimension_semantics = [#tpu.dimension_semantics<parallel>], iteration_bounds = array<i64: 1>, scalar_prefetch = 0 : i64, scratch_operands = 0 : i64, tpu.core_type = #tpu.core_type<tc>, window_params = [{transform_indices = @transform_0, window_bounds = array<i64: 16, 784>}, {pipeline_mode = #tpu.pipeline_mode<synchronous>, transform_indices = @transform_1, window_bounds = array<i64: 784, 512>}, {pipeline_mode = #tpu.pipeline_mode<synchronous>, transform_indices = @transform_2, window_bounds = array<i64: 1, 512>}, {pipeline_mode = #tpu.pipeline_mode<synchronous>, transform_indices = @transform_3, window_bounds = array<i64: 512, 256>}, {pipeline_mode = #tpu.pipeline_mode<synchronous>, transform_indices = @transform_4, window_bounds = array<i64: 1, 256>}, {pipeline_mode = #tpu.pipeline_mode<synchronous>, transform_indices = @transform_5, window_bounds = array<i64: 256, 128>}, {pipeline_mode = #tpu.pipeline_mode<synchronous>, transform_indices = @transform_6, window_bounds = array<i64: 1, 128>}, {pipeline_mode = #tpu.pipeline_mode<synchronous>, transform_indices = @transform_7, window_bounds = array<i64: 128, 64>}, {pipeline_mode = #tpu.pipeline_mode<synchronous>, transform_indices = @transform_8, window_bounds = array<i64: 1, 64>}, {pipeline_mode = #tpu.pipeline_mode<synchronous>, transform_indices = @transform_9, window_bounds = array<i64: 64, 32>}, {pipeline_mode = #tpu.pipeline_mode<synchronous>, transform_indices = @transform_10, window_bounds = array<i64: 1, 32>}, {pipeline_mode = #tpu.pipeline_mode<synchronous>, transform_indices = @transform_11, window_bounds = array<i64: 32, 128>}, {pipeline_mode = #tpu.pipeline_mode<synchronous>, transform_indices = @transform_12, window_bounds = array<i64: 1, 128>}, {transform_indices = @transform_13, window_bounds = array<i64: 16, 128>}]} {
    %c0 = arith.constant 0 : index
    %c0_0 = arith.constant 0 : index
    %0 = vector.load %arg1[%c0, %c0_0] : memref<16x784xf32, #tpu.memory_space<vmem>>, vector<16x784xf32>
    %1 = arith.truncf %0 : vector<16x784xf32> to vector<16x784xbf16>
    %c0_1 = arith.constant 0 : index
    %c0_2 = arith.constant 0 : index
    %2 = vector.load %arg2[%c0_1, %c0_2] : memref<784x512xbf16, #tpu.memory_space<vmem>>, vector<784x512xbf16>
    %cst = arith.constant dense<0.000000e+00> : vector<16x512xf32>
    %3 = tpu.matmul %1, %2, %cst {dimension_numbers = #tpu.dot_dimension_numbers<[1], [0], [0], [1], [0, 0, 1, 1], [], []>} : vector<16x784xbf16>, vector<784x512xbf16>, vector<16x512xf32> -> vector<16x512xf32>
    %c0_3 = arith.constant 0 : index
    %c0_4 = arith.constant 0 : index
    %4 = vector.load %arg3[%c0_3, %c0_4] : memref<1x512xf32, #tpu.memory_space<vmem>>, vector<1x512xf32>
    %5 = vector.broadcast %4 : vector<1x512xf32> to vector<16x512xf32>
    %6 = arith.addf %3, %5 : vector<16x512xf32>
    %cst_5 = arith.constant 0.000000e+00 : f32
    %7 = vector.broadcast %cst_5 : f32 to vector<16x512xf32>
    %8 = arith.maximumf %6, %7 : vector<16x512xf32>
    %9 = arith.truncf %8 : vector<16x512xf32> to vector<16x512xbf16>
    %c0_6 = arith.constant 0 : index
    %c0_7 = arith.constant 0 : index
    %10 = vector.load %arg4[%c0_6, %c0_7] : memref<512x256xbf16, #tpu.memory_space<vmem>>, vector<512x256xbf16>
    %cst_8 = arith.constant dense<0.000000e+00> : vector<16x256xf32>
    %11 = tpu.matmul %9, %10, %cst_8 {dimension_numbers = #tpu.dot_dimension_numbers<[1], [0], [0], [1], [0, 0, 1, 1], [], []>} : vector<16x512xbf16>, vector<512x256xbf16>, vector<16x256xf32> -> vector<16x256xf32>
    %c0_9 = arith.constant 0 : index
    %c0_10 = arith.constant 0 : index
    %12 = vector.load %arg5[%c0_9, %c0_10] : memref<1x256xf32, #tpu.memory_space<vmem>>, vector<1x256xf32>
    %13 = vector.broadcast %12 : vector<1x256xf32> to vector<16x256xf32>
    %14 = arith.addf %11, %13 : vector<16x256xf32>
    %cst_11 = arith.constant 0.000000e+00 : f32
    %15 = vector.broadcast %cst_11 : f32 to vector<16x256xf32>
    %16 = arith.maximumf %14, %15 : vector<16x256xf32>
    %17 = arith.truncf %16 : vector<16x256xf32> to vector<16x256xbf16>
    %c0_12 = arith.constant 0 : index
    %c0_13 = arith.constant 0 : index
    %18 = vector.load %arg6[%c0_12, %c0_13] : memref<256x128xbf16, #tpu.memory_space<vmem>>, vector<256x128xbf16>
    %cst_14 = arith.constant dense<0.000000e+00> : vector<16x128xf32>
    %19 = tpu.matmul %17, %18, %cst_14 {dimension_numbers = #tpu.dot_dimension_numbers<[1], [0], [0], [1], [0, 0, 1, 1], [], []>} : vector<16x256xbf16>, vector<256x128xbf16>, vector<16x128xf32> -> vector<16x128xf32>
    %c0_15 = arith.constant 0 : index
    %c0_16 = arith.constant 0 : index
    %20 = vector.load %arg7[%c0_15, %c0_16] : memref<1x128xf32, #tpu.memory_space<vmem>>, vector<1x128xf32>
    %21 = vector.broadcast %20 : vector<1x128xf32> to vector<16x128xf32>
    %22 = arith.addf %19, %21 : vector<16x128xf32>
    %cst_17 = arith.constant 0.000000e+00 : f32
    %23 = vector.broadcast %cst_17 : f32 to vector<16x128xf32>
    %24 = arith.maximumf %22, %23 : vector<16x128xf32>
    %25 = arith.truncf %24 : vector<16x128xf32> to vector<16x128xbf16>
    %c0_18 = arith.constant 0 : index
    %c0_19 = arith.constant 0 : index
    %26 = vector.load %arg8[%c0_18, %c0_19] : memref<128x64xbf16, #tpu.memory_space<vmem>>, vector<128x64xbf16>
    %cst_20 = arith.constant dense<0.000000e+00> : vector<16x64xf32>
    %27 = tpu.matmul %25, %26, %cst_20 {dimension_numbers = #tpu.dot_dimension_numbers<[1], [0], [0], [1], [0, 0, 1, 1], [], []>} : vector<16x128xbf16>, vector<128x64xbf16>, vector<16x64xf32> -> vector<16x64xf32>
    %c0_21 = arith.constant 0 : index
    %c0_22 = arith.constant 0 : index
    %28 = vector.load %arg9[%c0_21, %c0_22] : memref<1x64xf32, #tpu.memory_space<vmem>>, vector<1x64xf32>
    %29 = vector.broadcast %28 : vector<1x64xf32> to vector<16x64xf32>
    %30 = arith.addf %27, %29 : vector<16x64xf32>
    %cst_23 = arith.constant 0.000000e+00 : f32
    %31 = vector.broadcast %cst_23 : f32 to vector<16x64xf32>
    %32 = arith.maximumf %30, %31 : vector<16x64xf32>
    %33 = arith.truncf %32 : vector<16x64xf32> to vector<16x64xbf16>
    %c0_24 = arith.constant 0 : index
    %c0_25 = arith.constant 0 : index
    %34 = vector.load %arg10[%c0_24, %c0_25] : memref<64x32xbf16, #tpu.memory_space<vmem>>, vector<64x32xbf16>
    %cst_26 = arith.constant dense<0.000000e+00> : vector<16x32xf32>
    %35 = tpu.matmul %33, %34, %cst_26 {dimension_numbers = #tpu.dot_dimension_numbers<[1], [0], [0], [1], [0, 0, 1, 1], [], []>} : vector<16x64xbf16>, vector<64x32xbf16>, vector<16x32xf32> -> vector<16x32xf32>
    %c0_27 = arith.constant 0 : index
    %c0_28 = arith.constant 0 : index
    %36 = vector.load %arg11[%c0_27, %c0_28] : memref<1x32xf32, #tpu.memory_space<vmem>>, vector<1x32xf32>
    %37 = vector.broadcast %36 : vector<1x32xf32> to vector<16x32xf32>
    %38 = arith.addf %35, %37 : vector<16x32xf32>
    %cst_29 = arith.constant 0.000000e+00 : f32
    %39 = vector.broadcast %cst_29 : f32 to vector<16x32xf32>
    %40 = arith.maximumf %38, %39 : vector<16x32xf32>
    %41 = arith.truncf %40 : vector<16x32xf32> to vector<16x32xbf16>
    %c0_30 = arith.constant 0 : index
    %c0_31 = arith.constant 0 : index
    %42 = vector.load %arg12[%c0_30, %c0_31] : memref<32x128xbf16, #tpu.memory_space<vmem>>, vector<32x128xbf16>
    %cst_32 = arith.constant dense<0.000000e+00> : vector<16x128xf32>
    %43 = tpu.matmul %41, %42, %cst_32 {dimension_numbers = #tpu.dot_dimension_numbers<[1], [0], [0], [1], [0, 0, 1, 1], [], []>} : vector<16x32xbf16>, vector<32x128xbf16>, vector<16x128xf32> -> vector<16x128xf32>
    %c0_33 = arith.constant 0 : index
    %c0_34 = arith.constant 0 : index
    %44 = vector.load %arg13[%c0_33, %c0_34] : memref<1x128xf32, #tpu.memory_space<vmem>>, vector<1x128xf32>
    %45 = vector.broadcast %44 : vector<1x128xf32> to vector<16x128xf32>
    %46 = arith.addf %43, %45 : vector<16x128xf32>
    %47 = arith.truncf %46 : vector<16x128xf32> to vector<16x128xbf16>
    %c0_35 = arith.constant 0 : index
    %c0_36 = arith.constant 0 : index
    %48 = vector.load %arg14[%c0_35, %c0_36] : memref<16x128xbf16, #tpu.memory_space<vmem>>, vector<16x128xbf16>
    tpu.vector_store %arg14[%c0_35, %c0_36], %47 {strides = array<i32>} : memref<16x128xbf16, #tpu.memory_space<vmem>>, vector<16x128xbf16>,
    return
  }
  func.func @transform_0(%arg0: i32) -> (i32, i32) {
    %c0_i32 = arith.constant 0 : i32
    %c0_i32_0 = arith.constant 0 : i32
    return %arg0, %c0_i32 : i32, i32
  }
  func.func @transform_1(%arg0: i32) -> (i32, i32) {
    %c0_i32 = arith.constant 0 : i32
    %c0_i32_0 = arith.constant 0 : i32
    %c0_i32_1 = arith.constant 0 : i32
    return %c0_i32, %c0_i32_0 : i32, i32
  }
  func.func @transform_2(%arg0: i32) -> (i32, i32) {
    %c0_i32 = arith.constant 0 : i32
    %c0_i32_0 = arith.constant 0 : i32
    %c0_i32_1 = arith.constant 0 : i32
    return %c0_i32, %c0_i32_0 : i32, i32
  }
  func.func @transform_3(%arg0: i32) -> (i32, i32) {
    %c0_i32 = arith.constant 0 : i32
    %c0_i32_0 = arith.constant 0 : i32
    %c0_i32_1 = arith.constant 0 : i32
    return %c0_i32, %c0_i32_0 : i32, i32
  }
  func.func @transform_4(%arg0: i32) -> (i32, i32) {
    %c0_i32 = arith.constant 0 : i32
    %c0_i32_0 = arith.constant 0 : i32
    %c0_i32_1 = arith.constant 0 : i32
    return %c0_i32, %c0_i32_0 : i32, i32
  }
  func.func @transform_5(%arg0: i32) -> (i32, i32) {
    %c0_i32 = arith.constant 0 : i32
    %c0_i32_0 = arith.constant 0 : i32
    %c0_i32_1 = arith.constant 0 : i32
    return %c0_i32, %c0_i32_0 : i32, i32
  }
  func.func @transform_6(%arg0: i32) -> (i32, i32) {
    %c0_i32 = arith.constant 0 : i32
    %c0_i32_0 = arith.constant 0 : i32
    %c0_i32_1 = arith.constant 0 : i32
    return %c0_i32, %c0_i32_0 : i32, i32
  }
  func.func @transform_7(%arg0: i32) -> (i32, i32) {
    %c0_i32 = arith.constant 0 : i32
    %c0_i32_0 = arith.constant 0 : i32
    %c0_i32_1 = arith.constant 0 : i32
    return %c0_i32, %c0_i32_0 : i32, i32
  }
  func.func @transform_8(%arg0: i32) -> (i32, i32) {
    %c0_i32 = arith.constant 0 : i32
    %c0_i32_0 = arith.constant 0 : i32
    %c0_i32_1 = arith.constant 0 : i32
    return %c0_i32, %c0_i32_0 : i32, i32
  }
  func.func @transform_9(%arg0: i32) -> (i32, i32) {
    %c0_i32 = arith.constant 0 : i32
    %c0_i32_0 = arith.constant 0 : i32
    %c0_i32_1 = arith.constant 0 : i32
    return %c0_i32, %c0_i32_0 : i32, i32
  }
  func.func @transform_10(%arg0: i32) -> (i32, i32) {
    %c0_i32 = arith.constant 0 : i32
    %c0_i32_0 = arith.constant 0 : i32
    %c0_i32_1 = arith.constant 0 : i32
    return %c0_i32, %c0_i32_0 : i32, i32
  }
  func.func @transform_11(%arg0: i32) -> (i32, i32) {
    %c0_i32 = arith.constant 0 : i32
    %c0_i32_0 = arith.constant 0 : i32
    %c0_i32_1 = arith.constant 0 : i32
    return %c0_i32, %c0_i32_0 : i32, i32
  }
  func.func @transform_12(%arg0: i32) -> (i32, i32) {
    %c0_i32 = arith.constant 0 : i32
    %c0_i32_0 = arith.constant 0 : i32
    %c0_i32_1 = arith.constant 0 : i32
    return %c0_i32, %c0_i32_0 : i32, i32
  }
  func.func @transform_13(%arg0: i32) -> (i32, i32) {
    %c0_i32 = arith.constant 0 : i32
    %c0_i32_0 = arith.constant 0 : i32
    return %arg0, %c0_i32 : i32, i32
  }
}

</mosaic_0001>

<llo_original>
// kernel: tpu_custom_call.1
$region0: #{tpu_custom_call.1}
  #allocation0 [shape = 'u32[]', space=smem, size = 0x4, offset = 0x4, fixed_abs, tag = 'smem constant byte address 0x4 - core index']
  #allocation1 [shape = 'u32[144,128]{1,0:T(1,128)}', space=vmem, size = 0x12000, scoped, tag = 'internal scratch']
  %s0 = inlined_call_operand.hbm [shape: f32[16,784], index: 0, kind: input, shape index: {}]
  %s1 = inlined_call_operand.hbm [shape: bf16[784,512], index: 1, kind: input, shape index: {}]
  %s2 = inlined_call_operand.hbm [shape: f32[1,512], index: 2, kind: input, shape index: {}]
  %s3 = inlined_call_operand.hbm [shape: bf16[512,256], index: 3, kind: input, shape index: {}]
  %s4 = inlined_call_operand.vmem [shape: f32[1,256], index: 4, kind: input, shape index: {}]
  %s5 = inlined_call_operand.vmem [shape: bf16[256,128], index: 5, kind: input, shape index: {}]
  %s6 = inlined_call_operand.hbm [shape: f32[1,128], index: 6, kind: input, shape index: {}]
  %s7 = inlined_call_operand.vmem [shape: bf16[128,64], index: 7, kind: input, shape index: {}]
  %s8 = inlined_call_operand.hbm [shape: f32[1,64], index: 8, kind: input, shape index: {}]
  %s9 = inlined_call_operand.vmem [shape: bf16[64,32], index: 9, kind: input, shape index: {}]
  %s10 = inlined_call_operand.vmem [shape: f32[1,32], index: 10, kind: input, shape index: {}]
  %s11 = inlined_call_operand.vmem [shape: bf16[32,128], index: 11, kind: input, shape index: {}]
  %s12 = inlined_call_operand.vmem [shape: f32[1,128], index: 12, kind: input, shape index: {}]
  %s13 = inlined_call_operand.hbm [shape: bf16[16,128], index: 13, kind: output, shape index: {}]
  %s14 = sld [smem:[#allocation0]]
  $region86: #{tpu_custom_call.1} parent=0
    _
  %s16 = ssub.s32 1, %s14
  %s17 = scalar_select 0, %s16, %s14
  $region1: #{tpu_custom_call.1} parent=0
    #allocation2 [shape = 'u8[57344]{0}', space=vmem, size = 0xe000, scoped, tag = 'input window, operand 0, single buffered']
    #allocation3 [shape = 's32[1]{0}', space=sflag, size = 0x4, scoped, tag = 'scoped memory for tpu_custom_call.1']
    #allocation4 [shape = 's32[1]{0}', space=sflag, size = 0x4, scoped, tag = 'scoped memory for tpu_custom_call.1']
    #allocation5 [shape = 'u8[802816]{0}', space=vmem, size = 0xc4000, scoped, tag = 'input window, operand 1, single buffered']
    #allocation6 [shape = 's32[1]{0}', space=sflag, size = 0x4, scoped, tag = 'scoped memory for tpu_custom_call.1']
    #allocation7 [shape = 'u8[2048]{0}', space=vmem, size = 0x800, scoped, tag = 'input window, operand 2, single buffered']
    #allocation8 [shape = 'u8[262144]{0}', space=vmem, size = 0x40000, scoped, tag = 'input window, operand 3, single buffered']
    #allocation9 [shape = 's32[1]{0}', space=sflag, size = 0x4, scoped, tag = 'scoped memory for tpu_custom_call.1']
    #allocation10 [shape = 'u8[512]{0}', space=vmem, size = 0x400, scoped, tag = 'input window, operand 6, single buffered']
    #allocation11 [shape = 'u8[512]{0}', space=vmem, size = 0x400, scoped, tag = 'input window, operand 8, single buffered']
    #allocation12 [shape = 's32[1]{0}', space=sflag, size = 0x4, scoped, tag = 'scoped memory for tpu_custom_call.1']
    #allocation13 [shape = 'u8[4096]{0}', space=vmem, size = 0x1000, scoped, tag = 'output window, operand 0, single buffered']
    %18 = vsyncpa [#allocation3], 0
    %19 = vsyncpa [#allocation6], 0
    %20 = vsyncpa [#allocation9], 0
    %21 = vsyncpa [#allocation12], 0
    %22 = vsyncpa [#allocation4], 0
    // Predicated region
    $region2: #{tpu_custom_call.1} parent=1 // pred_check
      _
    $region3: #{tpu_custom_call.1} parent=1 // pred_check_branch
      %24 = sbr.rel (0) target = $region5
    $region4: #{tpu_custom_call.1} parent=1 // pred_region
      %s26 = ssub.s32 1792, 1792
      %27 = vsyncadd [#allocation3], %s26
      %s28 = sshll.u32 [#allocation2], 4
      %s29 = int_to_ptr.vmem [resolvable:$true] %s28
      %34 = dma.hbm_to_vmem [thread:$0]  %s0, 1792, %s29, [#allocation3], 896, 896, 56
    $region5: #{tpu_custom_call.1} parent=1 // pred_fallthru
      _
    // Predicated region
    $region6: #{tpu_custom_call.1} parent=1 // pred_check
      _
    $region7: #{tpu_custom_call.1} parent=1 // pred_check_branch
      %36 = sbr.rel (0) target = $region9
    $region8: #{tpu_custom_call.1} parent=1 // pred_region
      %s38 = ssub.s32 25088, 25088
      %39 = vsyncadd [#allocation6], %s38
      %s40 = sshll.u32 [#allocation5], 4
      %s41 = int_to_ptr.vmem [resolvable:$true] %s40
      %46 = dma.hbm_to_vmem [thread:$0]  %s1, 25088, %s41, [#allocation6], 256, 256, 16
    $region9: #{tpu_custom_call.1} parent=1 // pred_fallthru
      _
    // Predicated region
    $region10: #{tpu_custom_call.1} parent=1 // pred_check
      _
    $region11: #{tpu_custom_call.1} parent=1 // pred_check_branch
      %48 = sbr.rel (0) target = $region13
    $region12: #{tpu_custom_call.1} parent=1 // pred_region
      %s50 = ssub.s32 64, 64
      %51 = vsyncadd [#allocation6], %s50
      %s53 = sshll.u32 [#allocation7], 4
      %s54 = int_to_ptr.vmem [resolvable:$true] %s53
      %56 = dma.hbm_to_vmem [thread:$0]  %s2, 64, %s54, [#allocation6]
    $region13: #{tpu_custom_call.1} parent=1 // pred_fallthru
      _
    // Predicated region
    $region14: #{tpu_custom_call.1} parent=1 // pred_check
      _
    $region15: #{tpu_custom_call.1} parent=1 // pred_check_branch
      %58 = sbr.rel (0) target = $region17
    $region16: #{tpu_custom_call.1} parent=1 // pred_region
      %s60 = ssub.s32 8192, 8192
      %61 = vsyncadd [#allocation9], %s60
      %s62 = sshll.u32 [#allocation8], 4
      %s63 = int_to_ptr.vmem [resolvable:$true] %s62
      %68 = dma.hbm_to_vmem [thread:$0]  %s3, 8192, %s63, [#allocation9], 128, 128, 8
    $region17: #{tpu_custom_call.1} parent=1 // pred_fallthru
      _
    // Predicated region
    $region18: #{tpu_custom_call.1} parent=1 // pred_check
      _
    $region19: #{tpu_custom_call.1} parent=1 // pred_check_branch
      %70 = sbr.rel (0) target = $region21
    $region20: #{tpu_custom_call.1} parent=1 // pred_region
      _
    $region21: #{tpu_custom_call.1} parent=1 // pred_fallthru
      _
    // Predicated region
    $region22: #{tpu_custom_call.1} parent=1 // pred_check
      _
    $region23: #{tpu_custom_call.1} parent=1 // pred_check_branch
      %72 = sbr.rel (0) target = $region25
    $region24: #{tpu_custom_call.1} parent=1 // pred_region
      _
    $region25: #{tpu_custom_call.1} parent=1 // pred_fallthru
      _
    // Predicated region
    $region26: #{tpu_custom_call.1} parent=1 // pred_check
      _
    $region27: #{tpu_custom_call.1} parent=1 // pred_check_branch
      %74 = sbr.rel (0) target = $region29
    $region28: #{tpu_custom_call.1} parent=1 // pred_region
      %s76 = ssub.s32 16, 16
      %77 = vsyncadd [#allocation9], %s76
      %s79 = sshll.u32 [#allocation10], 4
      %s80 = int_to_ptr.vmem [resolvable:$true] %s79
      %82 = dma.hbm_to_vmem [thread:$0]  %s6, 16, %s80, [#allocation9]
    $region29: #{tpu_custom_call.1} parent=1 // pred_fallthru
      _
    // Predicated region
    $region30: #{tpu_custom_call.1} parent=1 // pred_check
      _
    $region31: #{tpu_custom_call.1} parent=1 // pred_check_branch
      %84 = sbr.rel (0) target = $region33
    $region32: #{tpu_custom_call.1} parent=1 // pred_region
      _
    $region33: #{tpu_custom_call.1} parent=1 // pred_fallthru
      _
    // Predicated region
    $region34: #{tpu_custom_call.1} parent=1 // pred_check
      _
    $region35: #{tpu_custom_call.1} parent=1 // pred_check_branch
      %86 = sbr.rel (0) target = $region37
    $region36: #{tpu_custom_call.1} parent=1 // pred_region
      %s88 = ssub.s32 16, 16
      %89 = vsyncadd [#allocation12], %s88
      %s91 = sshll.u32 [#allocation11], 4
      %s92 = int_to_ptr.vmem [resolvable:$true] %s91
      %94 = dma.hbm_to_vmem [thread:$0]  %s8, 16, %s92, [#allocation12]
    $region37: #{tpu_custom_call.1} parent=1 // pred_fallthru
      _
    // Predicated region
    $region38: #{tpu_custom_call.1} parent=1 // pred_check
      _
    $region39: #{tpu_custom_call.1} parent=1 // pred_check_branch
      %96 = sbr.rel (0) target = $region41
    $region40: #{tpu_custom_call.1} parent=1 // pred_region
      _
    $region41: #{tpu_custom_call.1} parent=1 // pred_fallthru
      _
    // Predicated region
    $region42: #{tpu_custom_call.1} parent=1 // pred_check
      _
    $region43: #{tpu_custom_call.1} parent=1 // pred_check_branch
      %98 = sbr.rel (0) target = $region45
    $region44: #{tpu_custom_call.1} parent=1 // pred_region
      _
    $region45: #{tpu_custom_call.1} parent=1 // pred_fallthru
      _
    // Predicated region
    $region46: #{tpu_custom_call.1} parent=1 // pred_check
      _
    $region47: #{tpu_custom_call.1} parent=1 // pred_check_branch
      %100 = sbr.rel (0) target = $region49
    $region48: #{tpu_custom_call.1} parent=1 // pred_region
      _
    $region49: #{tpu_custom_call.1} parent=1 // pred_fallthru
      _
    // Predicated region
    $region50: #{tpu_custom_call.1} parent=1 // pred_check
      _
    $region51: #{tpu_custom_call.1} parent=1 // pred_check_branch
      %102 = sbr.rel (0) target = $region53
    $region52: #{tpu_custom_call.1} parent=1 // pred_region
      _
    $region53: #{tpu_custom_call.1} parent=1 // pred_fallthru
      _
    // Predicated region
    $region54: #{tpu_custom_call.1} parent=1 // pred_check
      _
    $region55: #{tpu_custom_call.1} parent=1 // pred_check_branch
      %104 = sbr.rel (0) target = $region57
    $region56: #{tpu_custom_call.1} parent=1 // pred_region
      %105 = dma.done [#allocation3], 1792
    $region57: #{tpu_custom_call.1} parent=1 // pred_fallthru
      _
    // Predicated region
    $region58: #{tpu_custom_call.1} parent=1 // pred_check
      _
    $region59: #{tpu_custom_call.1} parent=1 // pred_check_branch
      %107 = sbr.rel (0) target = $region61
    $region60: #{tpu_custom_call.1} parent=1 // pred_region
      %108 = dma.done [#allocation6], 25088
    $region61: #{tpu_custom_call.1} parent=1 // pred_fallthru
      _
    // Predicated region
    $region62: #{tpu_custom_call.1} parent=1 // pred_check
      _
    $region63: #{tpu_custom_call.1} parent=1 // pred_check_branch
      %110 = sbr.rel (0) target = $region65
    $region64: #{tpu_custom_call.1} parent=1 // pred_region
      %111 = dma.done [#allocation6], 64
    $region65: #{tpu_custom_call.1} parent=1 // pred_fallthru
      _
    // Predicated region
    $region66: #{tpu_custom_call.1} parent=1 // pred_check
      _
    $region67: #{tpu_custom_call.1} parent=1 // pred_check_branch
      %113 = sbr.rel (0) target = $region69
    $region68: #{tpu_custom_call.1} parent=1 // pred_region
      %114 = dma.done [#allocation9], 8192
    $region69: #{tpu_custom_call.1} parent=1 // pred_fallthru
      _
    // Predicated region
    $region70: #{tpu_custom_call.1} parent=1 // pred_check
      _
    $region71: #{tpu_custom_call.1} parent=1 // pred_check_branch
      %116 = sbr.rel (0) target = $region73
    $region72: #{tpu_custom_call.1} parent=1 // pred_region
      %117 = dma.done [#allocation9], 16
    $region73: #{tpu_custom_call.1} parent=1 // pred_fallthru
      _
    // Predicated region
    $region74: #{tpu_custom_call.1} parent=1 // pred_check
      _
    $region75: #{tpu_custom_call.1} parent=1 // pred_check_branch
      %119 = sbr.rel (0) target = $region77
    $region76: #{tpu_custom_call.1} parent=1 // pred_region
      %120 = dma.done [#allocation12], 16
    $region77: #{tpu_custom_call.1} parent=1 // pred_fallthru
      _
    %v122 = vld [vmem:[#allocation2] sm:$0xff]
    %v123 = vld [vmem:[#allocation2 + $0x8] sm:$0xff]
    %v124 = vld [vmem:[#allocation2 + $0x10] sm:$0xff]
    %v125 = vld [vmem:[#allocation2 + $0x18] sm:$0xff]
    %v126 = vld [vmem:[#allocation2 + $0x20] sm:$0xff]
    %v127 = vld [vmem:[#allocation2 + $0x28] sm:$0xff]
    %v128 = vld [vmem:[#allocation2 + $0x30] sm:$0xff]
    %v129 = vld [vmem:[#allocation2 + $0x38] sm:$0xff]
    %v130 = vld [vmem:[#allocation2 + $0x40] sm:$0xff]
    %v131 = vld [vmem:[#allocation2 + $0x48] sm:$0xff]
    %v132 = vld [vmem:[#allocation2 + $0x50] sm:$0xff]
    %v133 = vld [vmem:[#allocation2 + $0x58] sm:$0xff]
    %v134 = vld [vmem:[#allocation2 + $0x60] sm:$0xff]
    %v135 = vld [vmem:[#allocation2 + $0x68] sm:$0xff]
    %v136 = vpack.c.bf16 %v129, %v122
    %v137 = vpack.c.bf16 %v130, %v123
    %v138 = vpack.c.bf16 %v131, %v124
    %v139 = vpack.c.bf16 %v132, %v125
    %v140 = vpack.c.bf16 %v133, %v126
    %v141 = vpack.c.bf16 %v134, %v127
    %v142 = vpack.c.bf16 %v135, %v128
    %v143 = vld [vmem:[#allocation5] sm:$0xff]
    %v144 = vld [vmem:[#allocation5 + $0x8] sm:$0xff]
    %v145 = vld [vmem:[#allocation5 + $0x10] sm:$0xff]
    %v146 = vld [vmem:[#allocation5 + $0x18] sm:$0xff]
    %v147 = vld [vmem:[#allocation5 + $0x20] sm:$0xff]
    %v148 = vld [vmem:[#allocation5 + $0x28] sm:$0xff]
    %v149 = vld [vmem:[#allocation5 + $0x30] sm:$0xff]
    %v150 = vld [vmem:[#allocation5 + $0x38] sm:$0xff]
    %v151 = vld [vmem:[#allocation5 + $0x40] sm:$0xff]
    %v152 = vld [vmem:[#allocation5 + $0x48] sm:$0xff]
    %v153 = vld [vmem:[#allocation5 + $0x50] sm:$0xff]
    %v154 = vld [vmem:[#allocation5 + $0x58] sm:$0xff]
    %v155 = vld [vmem:[#allocation5 + $0x60] sm:$0xff]
    %v156 = vld [vmem:[#allocation5 + $0x68] sm:$0xff]
    %v157 = vld [vmem:[#allocation5 + $0x70] sm:$0xff]
    %v158 = vld [vmem:[#allocation5 + $0x78] sm:$0xff]
    %v159 = vld [vmem:[#allocation5 + $0x80] sm:$0xff]
    %v160 = vld [vmem:[#allocation5 + $0x88] sm:$0xff]
    %v161 = vld [vmem:[#allocation5 + $0x90] sm:$0xff]
    %v162 = vld [vmem:[#allocation5 + $0x98] sm:$0xff]
    %v163 = vld [vmem:[#allocation5 + $0xa0] sm:$0xff]
    %v164 = vld [vmem:[#allocation5 + $0xa8] sm:$0xff]
    %v165 = vld [vmem:[#allocation5 + $0xb0] sm:$0xff]
    %v166 = vld [vmem:[#allocation5 + $0xb8] sm:$0xff]
    %v167 = vld [vmem:[#allocation5 + $0xc0] sm:$0xff]
    %v168 = vld [vmem:[#allocation5 + $0xc8] sm:$0xff]
    %v169 = vld [vmem:[#allocation5 + $0xd0] sm:$0xff]
    %v170 = vld [vmem:[#allocation5 + $0xd8] sm:$0xff]
    %v171 = vld [vmem:[#allocation5 + $0xe0] sm:$0xff]
    %v172 = vld [vmem:[#allocation5 + $0xe8] sm:$0xff]
    %v173 = vld [vmem:[#allocation5 + $0xf0] sm:$0xff]
    %v174 = vld [vmem:[#allocation5 + $0xf8] sm:$0xff]
    %v175 = vld [vmem:[#allocation5 + $0x100] sm:$0xff]
    %v176 = vld [vmem:[#allocation5 + $0x108] sm:$0xff]
    %v177 = vld [vmem:[#allocation5 + $0x110] sm:$0xff]
    %v178 = vld [vmem:[#allocation5 + $0x118] sm:$0xff]
    %v179 = vld [vmem:[#allocation5 + $0x120] sm:$0xff]
    %v180 = vld [vmem:[#allocation5 + $0x128] sm:$0xff]
    %v181 = vld [vmem:[#allocation5 + $0x130] sm:$0xff]
    %v182 = vld [vmem:[#allocation5 + $0x138] sm:$0xff]
    %v183 = vld [vmem:[#allocation5 + $0x140] sm:$0xff]
    %v184 = vld [vmem:[#allocation5 + $0x148] sm:$0xff]
    %v185 = vld [vmem:[#allocation5 + $0x150] sm:$0xff]
    %v186 = vld [vmem:[#allocation5 + $0x158] sm:$0xff]
    %v187 = vld [vmem:[#allocation5 + $0x160] sm:$0xff]
    %v188 = vld [vmem:[#allocation5 + $0x168] sm:$0xff]
    %v189 = vld [vmem:[#allocation5 + $0x170] sm:$0xff]
    %v190 = vld [vmem:[#allocation5 + $0x178] sm:$0xff]
    %v191 = vld [vmem:[#allocation5 + $0x180] sm:$0xff]
    %v192 = vld [vmem:[#allocation5 + $0x188] sm:$0xff]
    %v193 = vld [vmem:[#allocation5 + $0x190] sm:$0xff]
    %v194 = vld [vmem:[#allocation5 + $0x198] sm:$0xff]
    %v195 = vld [vmem:[#allocation5 + $0x1a0] sm:$0xff]
    %v196 = vld [vmem:[#allocation5 + $0x1a8] sm:$0xff]
    %v197 = vld [vmem:[#allocation5 + $0x1b0] sm:$0xff]
    %v198 = vld [vmem:[#allocation5 + $0x1b8] sm:$0xff]
    %v199 = vld [vmem:[#allocation5 + $0x1c0] sm:$0xff]
    %v200 = vld [vmem:[#allocation5 + $0x1c8] sm:$0xff]
    %v201 = vld [vmem:[#allocation5 + $0x1d0] sm:$0xff]
    %v202 = vld [vmem:[#allocation5 + $0x1d8] sm:$0xff]
    %v203 = vld [vmem:[#allocation5 + $0x1e0] sm:$0xff]
    %v204 = vld [vmem:[#allocation5 + $0x1e8] sm:$0xff]
    %v205 = vld [vmem:[#allocation5 + $0x1f0] sm:$0xff]
    %v206 = vld [vmem:[#allocation5 + $0x1f8] sm:$0xff]
    %v207 = vld [vmem:[#allocation5 + $0x200] sm:$0xff]
    %v208 = vld [vmem:[#allocation5 + $0x208] sm:$0xff]
    %v209 = vld [vmem:[#allocation5 + $0x210] sm:$0xff]
    %v210 = vld [vmem:[#allocation5 + $0x218] sm:$0xff]
    %v211 = vld [vmem:[#allocation5 + $0x220] sm:$0xff]
    %v212 = vld [vmem:[#allocation5 + $0x228] sm:$0xff]
    %v213 = vld [vmem:[#allocation5 + $0x230] sm:$0xff]
    %v214 = vld [vmem:[#allocation5 + $0x238] sm:$0xff]
    %v215 = vld [vmem:[#allocation5 + $0x240] sm:$0xff]
    %v216 = vld [vmem:[#allocation5 + $0x248] sm:$0xff]
    %v217 = vld [vmem:[#allocation5 + $0x250] sm:$0xff]
    %v218 = vld [vmem:[#allocation5 + $0x258] sm:$0xff]
    %v219 = vld [vmem:[#allocation5 + $0x260] sm:$0xff]
    %v220 = vld [vmem:[#allocation5 + $0x268] sm:$0xff]
    %v221 = vld [vmem:[#allocation5 + $0x270] sm:$0xff]
    %v222 = vld [vmem:[#allocation5 + $0x278] sm:$0xff]
    %v223 = vld [vmem:[#allocation5 + $0x280] sm:$0xff]
    %v224 = vld [vmem:[#allocation5 + $0x288] sm:$0xff]
    %v225 = vld [vmem:[#allocation5 + $0x290] sm:$0xff]
    %v226 = vld [vmem:[#allocation5 + $0x298] sm:$0xff]
    %v227 = vld [vmem:[#allocation5 + $0x2a0] sm:$0xff]
    %v228 = vld [vmem:[#allocation5 + $0x2a8] sm:$0xff]
    %v229 = vld [vmem:[#allocation5 + $0x2b0] sm:$0xff]
    %v230 = vld [vmem:[#allocation5 + $0x2b8] sm:$0xff]
    %v231 = vld [vmem:[#allocation5 + $0x2c0] sm:$0xff]
    %v232 = vld [vmem:[#allocation5 + $0x2c8] sm:$0xff]
    %v233 = vld [vmem:[#allocation5 + $0x2d0] sm:$0xff]
    %v234 = vld [vmem:[#allocation5 + $0x2d8] sm:$0xff]
    %v235 = vld [vmem:[#allocation5 + $0x2e0] sm:$0xff]
    %v236 = vld [vmem:[#allocation5 + $0x2e8] sm:$0xff]
    %v237 = vld [vmem:[#allocation5 + $0x2f0] sm:$0xff]
    %v238 = vld [vmem:[#allocation5 + $0x2f8] sm:$0xff]
    %v239 = vld [vmem:[#allocation5 + $0x300] sm:$0xff]
    %v240 = vld [vmem:[#allocation5 + $0x308] sm:$0xff]
    %v241 = vld [vmem:[#allocation5 + $0x310] sm:$0xff]
    %v242 = vld [vmem:[#allocation5 + $0x318] sm:$0xff]
    %v243 = vld [vmem:[#allocation5 + $0x320] sm:$0xff]
    %v244 = vld [vmem:[#allocation5 + $0x328] sm:$0xff]
    %v245 = vld [vmem:[#allocation5 + $0x330] sm:$0xff]
    %v246 = vld [vmem:[#allocation5 + $0x338] sm:$0xff]
    %v247 = vld [vmem:[#allocation5 + $0x340] sm:$0xff]
    %v248 = vld [vmem:[#allocation5 + $0x348] sm:$0xff]
    %v249 = vld [vmem:[#allocation5 + $0x350] sm:$0xff]
    %v250 = vld [vmem:[#allocation5 + $0x358] sm:$0xff]
    %v251 = vld [vmem:[#allocation5 + $0x360] sm:$0xff]
    %v252 = vld [vmem:[#allocation5 + $0x368] sm:$0xff]
    %v253 = vld [vmem:[#allocation5 + $0x370] sm:$0xff]
    %v254 = vld [vmem:[#allocation5 + $0x378] sm:$0xff]
    %v255 = vld [vmem:[#allocation5 + $0x380] sm:$0xff]
    %v256 = vld [vmem:[#allocation5 + $0x388] sm:$0xff]
    %v257 = vld [vmem:[#allocation5 + $0x390] sm:$0xff]
    %v258 = vld [vmem:[#allocation5 + $0x398] sm:$0xff]
    %v259 = vld [vmem:[#allocation5 + $0x3a0] sm:$0xff]
    %v260 = vld [vmem:[#allocation5 + $0x3a8] sm:$0xff]
    %v261 = vld [vmem:[#allocation5 + $0x3b0] sm:$0xff]
    %v262 = vld [vmem:[#allocation5 + $0x3b8] sm:$0xff]
    %v263 = vld [vmem:[#allocation5 + $0x3c0] sm:$0xff]
    %v264 = vld [vmem:[#allocation5 + $0x3c8] sm:$0xff]
    %v265 = vld [vmem:[#allocation5 + $0x3d0] sm:$0xff]
    %v266 = vld [vmem:[#allocation5 + $0x3d8] sm:$0xff]
    %v267 = vld [vmem:[#allocation5 + $0x3e0] sm:$0xff]
    %v268 = vld [vmem:[#allocation5 + $0x3e8] sm:$0xff]
    %v269 = vld [vmem:[#allocation5 + $0x3f0] sm:$0xff]
    %v270 = vld [vmem:[#allocation5 + $0x3f8] sm:$0xff]
    %v271 = vld [vmem:[#allocation5 + $0x400] sm:$0xff]
    %v272 = vld [vmem:[#allocation5 + $0x408] sm:$0xff]
    %v273 = vld [vmem:[#allocation5 + $0x410] sm:$0xff]
    %v274 = vld [vmem:[#allocation5 + $0x418] sm:$0xff]
    %v275 = vld [vmem:[#allocation5 + $0x420] sm:$0xff]
    %v276 = vld [vmem:[#allocation5 + $0x428] sm:$0xff]
    %v277 = vld [vmem:[#allocation5 + $0x430] sm:$0xff]
    %v278 = vld [vmem:[#allocation5 + $0x438] sm:$0xff]
    %v279 = vld [vmem:[#allocation5 + $0x440] sm:$0xff]
    %v280 = vld [vmem:[#allocation5 + $0x448] sm:$0xff]
    %v281 = vld [vmem:[#allocation5 + $0x450] sm:$0xff]
    %v282 = vld [vmem:[#allocation5 + $0x458] sm:$0xff]
    %v283 = vld [vmem:[#allocation5 + $0x460] sm:$0xff]
    %v284 = vld [vmem:[#allocation5 + $0x468] sm:$0xff]
    %v285 = vld [vmem:[#allocation5 + $0x470] sm:$0xff]
    %v286 = vld [vmem:[#allocation5 + $0x478] sm:$0xff]
    %v287 = vld [vmem:[#allocation5 + $0x480] sm:$0xff]
    %v288 = vld [vmem:[#allocation5 + $0x488] sm:$0xff]
    %v289 = vld [vmem:[#allocation5 + $0x490] sm:$0xff]
    %v290 = vld [vmem:[#allocation5 + $0x498] sm:$0xff]
    %v291 = vld [vmem:[#allocation5 + $0x4a0] sm:$0xff]
    %v292 = vld [vmem:[#allocation5 + $0x4a8] sm:$0xff]
    %v293 = vld [vmem:[#allocation5 + $0x4b0] sm:$0xff]
    %v294 = vld [vmem:[#allocation5 + $0x4b8] sm:$0xff]
    %v295 = vld [vmem:[#allocation5 + $0x4c0] sm:$0xff]
    %v296 = vld [vmem:[#allocation5 + $0x4c8] sm:$0xff]
    %v297 = vld [vmem:[#allocation5 + $0x4d0] sm:$0xff]
    %v298 = vld [vmem:[#allocation5 + $0x4d8] sm:$0xff]
    %v299 = vld [vmem:[#allocation5 + $0x4e0] sm:$0xff]
    %v300 = vld [vmem:[#allocation5 + $0x4e8] sm:$0xff]
    %v301 = vld [vmem:[#allocation5 + $0x4f0] sm:$0xff]
    %v302 = vld [vmem:[#allocation5 + $0x4f8] sm:$0xff]
    %v303 = vld [vmem:[#allocation5 + $0x500] sm:$0xff]
    %v304 = vld [vmem:[#allocation5 + $0x508] sm:$0xff]
    %v305 = vld [vmem:[#allocation5 + $0x510] sm:$0xff]
    %v306 = vld [vmem:[#allocation5 + $0x518] sm:$0xff]
    %v307 = vld [vmem:[#allocation5 + $0x520] sm:$0xff]
    %v308 = vld [vmem:[#allocation5 + $0x528] sm:$0xff]
    %v309 = vld [vmem:[#allocation5 + $0x530] sm:$0xff]
    %v310 = vld [vmem:[#allocation5 + $0x538] sm:$0xff]
    %v311 = vld [vmem:[#allocation5 + $0x540] sm:$0xff]
    %v312 = vld [vmem:[#allocation5 + $0x548] sm:$0xff]
    %v313 = vld [vmem:[#allocation5 + $0x550] sm:$0xff]
    %v314 = vld [vmem:[#allocation5 + $0x558] sm:$0xff]
    %v315 = vld [vmem:[#allocation5 + $0x560] sm:$0xff]
    %v316 = vld [vmem:[#allocation5 + $0x568] sm:$0xff]
    %v317 = vld [vmem:[#allocation5 + $0x570] sm:$0xff]
    %v318 = vld [vmem:[#allocation5 + $0x578] sm:$0xff]
    %v319 = vld [vmem:[#allocation5 + $0x580] sm:$0xff]
    %v320 = vld [vmem:[#allocation5 + $0x588] sm:$0xff]
    %v321 = vld [vmem:[#allocation5 + $0x590] sm:$0xff]
    %v322 = vld [vmem:[#allocation5 + $0x598] sm:$0xff]
    %v323 = vld [vmem:[#allocation5 + $0x5a0] sm:$0xff]
    %v324 = vld [vmem:[#allocation5 + $0x5a8] sm:$0xff]
    %v325 = vld [vmem:[#allocation5 + $0x5b0] sm:$0xff]
    %v326 = vld [vmem:[#allocation5 + $0x5b8] sm:$0xff]
    %v327 = vld [vmem:[#allocation5 + $0x5c0] sm:$0xff]
    %v328 = vld [vmem:[#allocation5 + $0x5c8] sm:$0xff]
    %v329 = vld [vmem:[#allocation5 + $0x5d0] sm:$0xff]
    %v330 = vld [vmem:[#allocation5 + $0x5d8] sm:$0xff]
    %v331 = vld [vmem:[#allocation5 + $0x5e0] sm:$0xff]
    %v332 = vld [vmem:[#allocation5 + $0x5e8] sm:$0xff]
    %v333 = vld [vmem:[#allocation5 + $0x5f0] sm:$0xff]
    %v334 = vld [vmem:[#allocation5 + $0x5f8] sm:$0xff]
    %v335 = vld [vmem:[#allocation5 + $0x600] sm:$0xff]
    %v336 = vld [vmem:[#allocation5 + $0x608] sm:$0xff]
    %v337 = vld [vmem:[#allocation5 + $0x610] sm:$0xff]
    %v338 = vld [vmem:[#allocation5 + $0x618] sm:$0xff]
    %v339 = vld [vmem:[#allocation7] sm:$0xf]
    %v341 = vlaneseq
    %v342 = vshrl.u32 %v341, 7
    %v343 = vsub.s32 0, %v342
    %v344 = vrot.slane %v339, %v343
    %v345 = vlaneseq
    %v346 = vshrl.u32 %v345, 7
    %v347 = vsub.s32 1, %v346
    %v348 = vrot.slane %v339, %v347
    %v349 = vlaneseq
    %v350 = vshrl.u32 %v349, 7
    %v351 = vsub.s32 2, %v350
    %v352 = vrot.slane %v339, %v351
    %v353 = vlaneseq
    %v354 = vshrl.u32 %v353, 7
    %v355 = vsub.s32 3, %v354
    %v356 = vrot.slane %v339, %v355
    %v557 = vunpack.c.l.b16 %v143
    %v558 = vunpack.c.h.b16 %v143
    %v559 = vunpack.c.l.b16 %v144
    %v560 = vunpack.c.h.b16 %v144
    %v561 = vunpack.c.l.b16 %v145
    %v562 = vunpack.c.h.b16 %v145
    %v563 = vunpack.c.l.b16 %v146
    %v564 = vunpack.c.h.b16 %v146
    %v565 = vunpack.c.l.b16 %v147
    %v566 = vunpack.c.h.b16 %v147
    %v567 = vunpack.c.l.b16 %v148
    %v568 = vunpack.c.h.b16 %v148
    %v569 = vunpack.c.l.b16 %v149
    %v570 = vunpack.c.h.b16 %v149
    %v571 = vunpack.c.l.b16 %v150
    %v572 = vunpack.c.h.b16 %v150
    %v573 = vunpack.c.l.b16 %v151
    %v574 = vunpack.c.h.b16 %v151
    %v575 = vunpack.c.l.b16 %v152
    %v576 = vunpack.c.h.b16 %v152
    %v577 = vunpack.c.l.b16 %v153
    %v578 = vunpack.c.h.b16 %v153
    %v579 = vunpack.c.l.b16 %v154
    %v580 = vunpack.c.h.b16 %v154
    %v581 = vunpack.c.l.b16 %v155
    %v582 = vunpack.c.h.b16 %v155
    %v583 = vunpack.c.l.b16 %v156
    %v584 = vunpack.c.h.b16 %v156
    %v585 = vunpack.c.l.b16 %v157
    %v586 = vunpack.c.h.b16 %v157
    %v587 = vunpack.c.l.b16 %v158
    %v588 = vunpack.c.h.b16 %v158
    %v589 = vunpack.c.l.b16 %v159
    %v590 = vunpack.c.h.b16 %v159
    %v591 = vunpack.c.l.b16 %v160
    %v592 = vunpack.c.h.b16 %v160
    %v593 = vunpack.c.l.b16 %v161
    %v594 = vunpack.c.h.b16 %v161
    %v595 = vunpack.c.l.b16 %v162
    %v596 = vunpack.c.h.b16 %v162
    %v597 = vunpack.c.l.b16 %v163
    %v598 = vunpack.c.h.b16 %v163
    %v599 = vunpack.c.l.b16 %v164
    %v600 = vunpack.c.h.b16 %v164
    %v601 = vunpack.c.l.b16 %v165
    %v602 = vunpack.c.h.b16 %v165
    %v603 = vunpack.c.l.b16 %v166
    %v604 = vunpack.c.h.b16 %v166
    %v605 = vunpack.c.l.b16 %v167
    %v606 = vunpack.c.h.b16 %v167
    %v607 = vunpack.c.l.b16 %v168
    %v608 = vunpack.c.h.b16 %v168
    %v609 = vunpack.c.l.b16 %v169
    %v610 = vunpack.c.h.b16 %v169
    %v611 = vunpack.c.l.b16 %v170
    %v612 = vunpack.c.h.b16 %v170
    %v613 = vunpack.c.l.b16 %v171
    %v614 = vunpack.c.h.b16 %v171
    %v615 = vunpack.c.l.b16 %v172
    %v616 = vunpack.c.h.b16 %v172
    %v617 = vunpack.c.l.b16 %v173
    %v618 = vunpack.c.h.b16 %v173
    %v619 = vunpack.c.l.b16 %v174
    %v620 = vunpack.c.h.b16 %v174
    %v621 = vunpack.c.l.b16 %v175
    %v622 = vunpack.c.h.b16 %v175
    %v623 = vunpack.c.l.b16 %v176
    %v624 = vunpack.c.h.b16 %v176
    %v625 = vunpack.c.l.b16 %v177
    %v626 = vunpack.c.h.b16 %v177
    %v627 = vunpack.c.l.b16 %v178
    %v628 = vunpack.c.h.b16 %v178
    %v629 = vunpack.c.l.b16 %v179
    %v630 = vunpack.c.h.b16 %v179
    %v631 = vunpack.c.l.b16 %v180
    %v632 = vunpack.c.h.b16 %v180
    %v633 = vunpack.c.l.b16 %v181
    %v634 = vunpack.c.h.b16 %v181
    %v635 = vunpack.c.l.b16 %v182
    %v636 = vunpack.c.h.b16 %v182
    %v637 = vunpack.c.l.b16 %v183
    %v638 = vunpack.c.h.b16 %v183
    %v639 = vunpack.c.l.b16 %v184
    %v640 = vunpack.c.h.b16 %v184
    %v641 = vunpack.c.l.b16 %v185
    %v642 = vunpack.c.h.b16 %v185
    %v643 = vunpack.c.l.b16 %v186
    %v644 = vunpack.c.h.b16 %v186
    %v645 = vunpack.c.l.b16 %v187
    %v646 = vunpack.c.h.b16 %v187
    %v647 = vunpack.c.l.b16 %v188
    %v648 = vunpack.c.h.b16 %v188
    %v649 = vunpack.c.l.b16 %v189
    %v650 = vunpack.c.h.b16 %v189
    %v651 = vunpack.c.l.b16 %v190
    %v652 = vunpack.c.h.b16 %v190
    %v653 = vunpack.c.l.b16 %v191
    %v654 = vunpack.c.h.b16 %v191
    %v655 = vunpack.c.l.b16 %v192
    %v656 = vunpack.c.h.b16 %v192
    %v657 = vunpack.c.l.b16 %v193
    %v658 = vunpack.c.h.b16 %v193
    %v659 = vunpack.c.l.b16 %v194
    %v660 = vunpack.c.h.b16 %v194
    %v661 = vunpack.c.l.b16 %v195
    %v662 = vunpack.c.h.b16 %v195
    %v663 = vunpack.c.l.b16 %v196
    %v664 = vunpack.c.h.b16 %v196
    %v665 = vunpack.c.l.b16 %v197
    %v666 = vunpack.c.h.b16 %v197
    %v667 = vunpack.c.l.b16 %v198
    %v668 = vunpack.c.h.b16 %v198
    %v669 = vunpack.c.l.b16 %v199
    %v670 = vunpack.c.h.b16 %v199
    %v671 = vunpack.c.l.b16 %v200
    %v672 = vunpack.c.h.b16 %v200
    %v673 = vunpack.c.l.b16 %v201
    %v674 = vunpack.c.h.b16 %v201
    %v675 = vunpack.c.l.b16 %v202
    %v676 = vunpack.c.h.b16 %v202
    %v677 = vunpack.c.l.b16 %v203
    %v678 = vunpack.c.h.b16 %v203
    %v679 = vunpack.c.l.b16 %v204
    %v680 = vunpack.c.h.b16 %v204
    %v681 = vunpack.c.l.b16 %v205
    %v682 = vunpack.c.h.b16 %v205
    %v683 = vunpack.c.l.b16 %v206
    %v684 = vunpack.c.h.b16 %v206
    %v685 = vunpack.c.l.b16 %v207
    %v686 = vunpack.c.h.b16 %v207
    %v687 = vunpack.c.l.b16 %v208
    %v688 = vunpack.c.h.b16 %v208
    %v689 = vunpack.c.l.b16 %v209
    %v690 = vunpack.c.h.b16 %v209
    %v691 = vunpack.c.l.b16 %v210
    %v692 = vunpack.c.h.b16 %v210
    %v693 = vunpack.c.l.b16 %v211
    %v694 = vunpack.c.h.b16 %v211
    %v695 = vunpack.c.l.b16 %v212
    %v696 = vunpack.c.h.b16 %v212
    %v697 = vunpack.c.l.b16 %v213
    %v698 = vunpack.c.h.b16 %v213
    %v699 = vunpack.c.l.b16 %v214
    %v700 = vunpack.c.h.b16 %v214
    %v701 = vunpack.c.l.b16 %v215
    %v702 = vunpack.c.h.b16 %v215
    %v703 = vunpack.c.l.b16 %v216
    %v704 = vunpack.c.h.b16 %v216
    %v705 = vunpack.c.l.b16 %v217
    %v706 = vunpack.c.h.b16 %v217
    %v707 = vunpack.c.l.b16 %v218
    %v708 = vunpack.c.h.b16 %v218
    %v709 = vunpack.c.l.b16 %v219
    %v710 = vunpack.c.h.b16 %v219
    %v711 = vunpack.c.l.b16 %v220
    %v712 = vunpack.c.h.b16 %v220
    %v713 = vunpack.c.l.b16 %v221
    %v714 = vunpack.c.h.b16 %v221
    %v715 = vunpack.c.l.b16 %v222
    %v716 = vunpack.c.h.b16 %v222
    %v717 = vunpack.c.l.b16 %v223
    %v718 = vunpack.c.h.b16 %v223
    %v719 = vunpack.c.l.b16 %v224
    %v720 = vunpack.c.h.b16 %v224
    %v721 = vunpack.c.l.b16 %v225
    %v722 = vunpack.c.h.b16 %v225
    %v723 = vunpack.c.l.b16 %v226
    %v724 = vunpack.c.h.b16 %v226
    %v725 = vunpack.c.l.b16 %v227
    %v726 = vunpack.c.h.b16 %v227
    %v727 = vunpack.c.l.b16 %v228
    %v728 = vunpack.c.h.b16 %v228
    %v729 = vunpack.c.l.b16 %v229
    %v730 = vunpack.c.h.b16 %v229
    %v731 = vunpack.c.l.b16 %v230
    %v732 = vunpack.c.h.b16 %v230
    %v733 = vunpack.c.l.b16 %v231
    %v734 = vunpack.c.h.b16 %v231
    %v735 = vunpack.c.l.b16 %v232
    %v736 = vunpack.c.h.b16 %v232
    %v737 = vunpack.c.l.b16 %v233
    %v738 = vunpack.c.h.b16 %v233
    %v739 = vunpack.c.l.b16 %v234
    %v740 = vunpack.c.h.b16 %v234
    %v741 = vunpack.c.l.b16 %v235
    %v742 = vunpack.c.h.b16 %v235
    %v743 = vunpack.c.l.b16 %v236
    %v744 = vunpack.c.h.b16 %v236
    %v745 = vunpack.c.l.b16 %v237
    %v746 = vunpack.c.h.b16 %v237
    %v747 = vunpack.c.l.b16 %v238
    %v748 = vunpack.c.h.b16 %v238
    %v749 = vunpack.c.l.b16 %v239
    %v750 = vunpack.c.h.b16 %v239
    %v751 = vunpack.c.l.b16 %v240
    %v752 = vunpack.c.h.b16 %v240
    %v753 = vunpack.c.l.b16 %v241
    %v754 = vunpack.c.h.b16 %v241
    %v755 = vunpack.c.l.b16 %v242
    %v756 = vunpack.c.h.b16 %v242
    %v757 = vunpack.c.l.b16 %v243
    %v758 = vunpack.c.h.b16 %v243
    %v759 = vunpack.c.l.b16 %v244
    %v760 = vunpack.c.h.b16 %v244
    %v761 = vunpack.c.l.b16 %v245
    %v762 = vunpack.c.h.b16 %v245
    %v763 = vunpack.c.l.b16 %v246
    %v764 = vunpack.c.h.b16 %v246
    %v765 = vunpack.c.l.b16 %v247
    %v766 = vunpack.c.h.b16 %v247
    %v767 = vunpack.c.l.b16 %v248
    %v768 = vunpack.c.h.b16 %v248
    %v769 = vunpack.c.l.b16 %v249
    %v770 = vunpack.c.h.b16 %v249
    %v771 = vunpack.c.l.b16 %v250
    %v772 = vunpack.c.h.b16 %v250
    %v773 = vunpack.c.l.b16 %v251
    %v774 = vunpack.c.h.b16 %v251
    %v775 = vunpack.c.l.b16 %v252
    %v776 = vunpack.c.h.b16 %v252
    %v777 = vunpack.c.l.b16 %v253
    %v778 = vunpack.c.h.b16 %v253
    %v779 = vunpack.c.l.b16 %v254
    %v780 = vunpack.c.h.b16 %v254
    %v781 = vunpack.c.l.b16 %v255
    %v782 = vunpack.c.h.b16 %v255
    %v783 = vunpack.c.l.b16 %v256
    %v784 = vunpack.c.h.b16 %v256
    %v785 = vunpack.c.l.b16 %v257
    %v786 = vunpack.c.h.b16 %v257
    %v787 = vunpack.c.l.b16 %v258
    %v788 = vunpack.c.h.b16 %v258
    %v789 = vunpack.c.l.b16 %v259
    %v790 = vunpack.c.h.b16 %v259
    %v791 = vunpack.c.l.b16 %v260
    %v792 = vunpack.c.h.b16 %v260
    %v793 = vunpack.c.l.b16 %v261
    %v794 = vunpack.c.h.b16 %v261
    %v795 = vunpack.c.l.b16 %v262
    %v796 = vunpack.c.h.b16 %v262
    %v797 = vunpack.c.l.b16 %v263
    %v798 = vunpack.c.h.b16 %v263
    %v799 = vunpack.c.l.b16 %v264
    %v800 = vunpack.c.h.b16 %v264
    %v801 = vunpack.c.l.b16 %v265
    %v802 = vunpack.c.h.b16 %v265
    %v803 = vunpack.c.l.b16 %v266
    %v804 = vunpack.c.h.b16 %v266
    %v805 = vunpack.c.l.b16 %v267
    %v806 = vunpack.c.h.b16 %v267
    %v807 = vunpack.c.l.b16 %v268
    %v808 = vunpack.c.h.b16 %v268
    %v809 = vunpack.c.l.b16 %v269
    %v810 = vunpack.c.h.b16 %v269
    %v811 = vunpack.c.l.b16 %v270
    %v812 = vunpack.c.h.b16 %v270
    %v813 = vunpack.c.l.b16 %v271
    %v814 = vunpack.c.h.b16 %v271
    %v815 = vunpack.c.l.b16 %v272
    %v816 = vunpack.c.h.b16 %v272
    %v817 = vunpack.c.l.b16 %v273
    %v818 = vunpack.c.h.b16 %v273
    %v819 = vunpack.c.l.b16 %v274
    %v820 = vunpack.c.h.b16 %v274
    %v821 = vunpack.c.l.b16 %v275
    %v822 = vunpack.c.h.b16 %v275
    %v823 = vunpack.c.l.b16 %v276
    %v824 = vunpack.c.h.b16 %v276
    %v825 = vunpack.c.l.b16 %v277
    %v826 = vunpack.c.h.b16 %v277
    %v827 = vunpack.c.l.b16 %v278
    %v828 = vunpack.c.h.b16 %v278
    %v829 = vunpack.c.l.b16 %v279
    %v830 = vunpack.c.h.b16 %v279
    %v831 = vunpack.c.l.b16 %v280
    %v832 = vunpack.c.h.b16 %v280
    %v833 = vunpack.c.l.b16 %v281
    %v834 = vunpack.c.h.b16 %v281
    %v835 = vunpack.c.l.b16 %v282
    %v836 = vunpack.c.h.b16 %v282
    %v837 = vunpack.c.l.b16 %v283
    %v838 = vunpack.c.h.b16 %v283
    %v839 = vunpack.c.l.b16 %v284
    %v840 = vunpack.c.h.b16 %v284
    %v841 = vunpack.c.l.b16 %v285
    %v842 = vunpack.c.h.b16 %v285
    %v843 = vunpack.c.l.b16 %v286
    %v844 = vunpack.c.h.b16 %v286
    %v845 = vunpack.c.l.b16 %v287
    %v846 = vunpack.c.h.b16 %v287
    %v847 = vunpack.c.l.b16 %v288
    %v848 = vunpack.c.h.b16 %v288
    %v849 = vunpack.c.l.b16 %v289
    %v850 = vunpack.c.h.b16 %v289
    %v851 = vunpack.c.l.b16 %v290
    %v852 = vunpack.c.h.b16 %v290
    %v853 = vunpack.c.l.b16 %v291
    %v854 = vunpack.c.h.b16 %v291
    %v855 = vunpack.c.l.b16 %v292
    %v856 = vunpack.c.h.b16 %v292
    %v857 = vunpack.c.l.b16 %v293
    %v858 = vunpack.c.h.b16 %v293
    %v859 = vunpack.c.l.b16 %v294
    %v860 = vunpack.c.h.b16 %v294
    %v861 = vunpack.c.l.b16 %v295
    %v862 = vunpack.c.h.b16 %v295
    %v863 = vunpack.c.l.b16 %v296
    %v864 = vunpack.c.h.b16 %v296
    %v865 = vunpack.c.l.b16 %v297
    %v866 = vunpack.c.h.b16 %v297
    %v867 = vunpack.c.l.b16 %v298
    %v868 = vunpack.c.h.b16 %v298
    %v869 = vunpack.c.l.b16 %v299
    %v870 = vunpack.c.h.b16 %v299
    %v871 = vunpack.c.l.b16 %v300
    %v872 = vunpack.c.h.b16 %v300
    %v873 = vunpack.c.l.b16 %v301
    %v874 = vunpack.c.h.b16 %v301
    %v875 = vunpack.c.l.b16 %v302
    %v876 = vunpack.c.h.b16 %v302
    %v877 = vunpack.c.l.b16 %v303
    %v878 = vunpack.c.h.b16 %v303
    %v879 = vunpack.c.l.b16 %v304
    %v880 = vunpack.c.h.b16 %v304
    %v881 = vunpack.c.l.b16 %v305
    %v882 = vunpack.c.h.b16 %v305
    %v883 = vunpack.c.l.b16 %v306
    %v884 = vunpack.c.h.b16 %v306
    %v885 = vunpack.c.l.b16 %v307
    %v886 = vunpack.c.h.b16 %v307
    %v887 = vunpack.c.l.b16 %v308
    %v888 = vunpack.c.h.b16 %v308
    %v889 = vunpack.c.l.b16 %v309
    %v890 = vunpack.c.h.b16 %v309
    %v891 = vunpack.c.l.b16 %v310
    %v892 = vunpack.c.h.b16 %v310
    %v893 = vunpack.c.l.b16 %v311
    %v894 = vunpack.c.h.b16 %v311
    %v895 = vunpack.c.l.b16 %v312
    %v896 = vunpack.c.h.b16 %v312
    %v897 = vunpack.c.l.b16 %v313
    %v898 = vunpack.c.h.b16 %v313
    %v899 = vunpack.c.l.b16 %v314
    %v900 = vunpack.c.h.b16 %v314
    %v901 = vunpack.c.l.b16 %v315
    %v902 = vunpack.c.h.b16 %v315
    %v903 = vunpack.c.l.b16 %v316
    %v904 = vunpack.c.h.b16 %v316
    %v905 = vunpack.c.l.b16 %v317
    %v906 = vunpack.c.h.b16 %v317
    %v907 = vunpack.c.l.b16 %v318
    %v908 = vunpack.c.h.b16 %v318
    %v909 = vunpack.c.l.b16 %v319
    %v910 = vunpack.c.h.b16 %v319
    %v911 = vunpack.c.l.b16 %v320
    %v912 = vunpack.c.h.b16 %v320
    %v913 = vunpack.c.l.b16 %v321
    %v914 = vunpack.c.h.b16 %v321
    %v915 = vunpack.c.l.b16 %v322
    %v916 = vunpack.c.h.b16 %v322
    %v917 = vunpack.c.l.b16 %v323
    %v918 = vunpack.c.h.b16 %v323
    %v919 = vunpack.c.l.b16 %v324
    %v920 = vunpack.c.h.b16 %v324
    %v921 = vunpack.c.l.b16 %v325
    %v922 = vunpack.c.h.b16 %v325
    %v923 = vunpack.c.l.b16 %v326
    %v924 = vunpack.c.h.b16 %v326
    %v925 = vunpack.c.l.b16 %v327
    %v926 = vunpack.c.h.b16 %v327
    %v927 = vunpack.c.l.b16 %v328
    %v928 = vunpack.c.h.b16 %v328
    %v929 = vunpack.c.l.b16 %v329
    %v930 = vunpack.c.h.b16 %v329
    %v931 = vunpack.c.l.b16 %v330
    %v932 = vunpack.c.h.b16 %v330
    %v933 = vunpack.c.l.b16 %v331
    %v934 = vunpack.c.h.b16 %v331
    %v935 = vunpack.c.l.b16 %v332
    %v936 = vunpack.c.h.b16 %v332
    %v937 = vunpack.c.l.b16 %v333
    %v938 = vunpack.c.h.b16 %v333
    %v939 = vunpack.c.l.b16 %v334
    %v940 = vunpack.c.h.b16 %v334
    %v941 = vunpack.c.l.b16 %v335
    %v942 = vunpack.c.h.b16 %v335
    %v943 = vunpack.c.l.b16 %v336
    %v944 = vunpack.c.h.b16 %v336
    %v945 = vunpack.c.l.b16 %v337
    %v946 = vunpack.c.h.b16 %v337
    %v947 = vunpack.c.l.b16 %v338
    %v948 = vunpack.c.h.b16 %v338
    %v949 = vpack.c.b16 %v561, %v557
    %v950 = vpack.c.b16 %v562, %v558
    %v951 = vpack.c.b16 %v563, %v559
    %v952 = vpack.c.b16 %v564, %v560
    %v953 = vpack.c.b16 %v569, %v565
    %v954 = vpack.c.b16 %v570, %v566
    %v955 = vpack.c.b16 %v571, %v567
    %v956 = vpack.c.b16 %v572, %v568
    %v957 = vpack.c.b16 %v577, %v573
    %v958 = vpack.c.b16 %v578, %v574
    %v959 = vpack.c.b16 %v579, %v575
    %v960 = vpack.c.b16 %v580, %v576
    %v961 = vpack.c.b16 %v585, %v581
    %v962 = vpack.c.b16 %v586, %v582
    %v963 = vpack.c.b16 %v587, %v583
    %v964 = vpack.c.b16 %v588, %v584
    %v965 = vpack.c.b16 %v593, %v589
    %v966 = vpack.c.b16 %v594, %v590
    %v967 = vpack.c.b16 %v595, %v591
    %v968 = vpack.c.b16 %v596, %v592
    %v969 = vpack.c.b16 %v601, %v597
    %v970 = vpack.c.b16 %v602, %v598
    %v971 = vpack.c.b16 %v603, %v599
    %v972 = vpack.c.b16 %v604, %v600
    %v973 = vpack.c.b16 %v609, %v605
    %v974 = vpack.c.b16 %v610, %v606
    %v975 = vpack.c.b16 %v611, %v607
    %v976 = vpack.c.b16 %v612, %v608
    %v977 = vpack.c.b16 %v617, %v613
    %v978 = vpack.c.b16 %v618, %v614
    %v979 = vpack.c.b16 %v619, %v615
    %v980 = vpack.c.b16 %v620, %v616
    %v981 = vpack.c.b16 %v625, %v621
    %v982 = vpack.c.b16 %v626, %v622
    %v983 = vpack.c.b16 %v627, %v623
    %v984 = vpack.c.b16 %v628, %v624
    %v985 = vpack.c.b16 %v633, %v629
    %v986 = vpack.c.b16 %v634, %v630
    %v987 = vpack.c.b16 %v635, %v631
    %v988 = vpack.c.b16 %v636, %v632
    %v989 = vpack.c.b16 %v641, %v637
    %v990 = vpack.c.b16 %v642, %v638
    %v991 = vpack.c.b16 %v643, %v639
    %v992 = vpack.c.b16 %v644, %v640
    %v993 = vpack.c.b16 %v649, %v645
    %v994 = vpack.c.b16 %v650, %v646
    %v995 = vpack.c.b16 %v651, %v647
    %v996 = vpack.c.b16 %v652, %v648
    %v997 = vpack.c.b16 %v657, %v653
    %v998 = vpack.c.b16 %v658, %v654
    %v999 = vpack.c.b16 %v659, %v655
    %v1000 = vpack.c.b16 %v660, %v656
    %v1001 = vpack.c.b16 %v665, %v661
    %v1002 = vpack.c.b16 %v666, %v662
    %v1003 = vpack.c.b16 %v667, %v663
    %v1004 = vpack.c.b16 %v668, %v664
    %v1005 = vpack.c.b16 %v673, %v669
    %v1006 = vpack.c.b16 %v674, %v670
    %v1007 = vpack.c.b16 %v675, %v671
    %v1008 = vpack.c.b16 %v676, %v672
    %v1009 = vpack.c.b16 %v681, %v677
    %v1010 = vpack.c.b16 %v682, %v678
    %v1011 = vpack.c.b16 %v683, %v679
    %v1012 = vpack.c.b16 %v684, %v680
    %v1013 = vpack.c.b16 %v689, %v685
    %v1014 = vpack.c.b16 %v690, %v686
    %v1015 = vpack.c.b16 %v691, %v687
    %v1016 = vpack.c.b16 %v692, %v688
    %v1017 = vpack.c.b16 %v697, %v693
    %v1018 = vpack.c.b16 %v698, %v694
    %v1019 = vpack.c.b16 %v699, %v695
    %v1020 = vpack.c.b16 %v700, %v696
    %v1021 = vpack.c.b16 %v705, %v701
    %v1022 = vpack.c.b16 %v706, %v702
    %v1023 = vpack.c.b16 %v707, %v703
    %v1024 = vpack.c.b16 %v708, %v704
    %v1025 = vpack.c.b16 %v713, %v709
    %v1026 = vpack.c.b16 %v714, %v710
    %v1027 = vpack.c.b16 %v715, %v711
    %v1028 = vpack.c.b16 %v716, %v712
    %v1029 = vpack.c.b16 %v721, %v717
    %v1030 = vpack.c.b16 %v722, %v718
    %v1031 = vpack.c.b16 %v723, %v719
    %v1032 = vpack.c.b16 %v724, %v720
    %v1033 = vpack.c.b16 %v729, %v725
    %v1034 = vpack.c.b16 %v730, %v726
    %v1035 = vpack.c.b16 %v731, %v727
    %v1036 = vpack.c.b16 %v732, %v728
    %v1037 = vpack.c.b16 %v737, %v733
    %v1038 = vpack.c.b16 %v738, %v734
    %v1039 = vpack.c.b16 %v739, %v735
    %v1040 = vpack.c.b16 %v740, %v736
    %v1041 = vpack.c.b16 %v745, %v741
    %v1042 = vpack.c.b16 %v746, %v742
    %v1043 = vpack.c.b16 %v747, %v743
    %v1044 = vpack.c.b16 %v748, %v744
    %v1045 = vpack.c.b16 %v753, %v749
    %v1046 = vpack.c.b16 %v754, %v750
    %v1047 = vpack.c.b16 %v755, %v751
    %v1048 = vpack.c.b16 %v756, %v752
    %v1049 = vpack.c.b16 %v761, %v757
    %v1050 = vpack.c.b16 %v762, %v758
    %v1051 = vpack.c.b16 %v763, %v759
    %v1052 = vpack.c.b16 %v764, %v760
    %v1053 = vpack.c.b16 %v769, %v765
    %v1054 = vpack.c.b16 %v770, %v766
    %v1055 = vpack.c.b16 %v771, %v767
    %v1056 = vpack.c.b16 %v772, %v768
    %v1057 = vpack.c.b16 %v777, %v773
    %v1058 = vpack.c.b16 %v778, %v774
    %v1059 = vpack.c.b16 %v779, %v775
    %v1060 = vpack.c.b16 %v780, %v776
    %v1061 = vpack.c.b16 %v785, %v781
    %v1062 = vpack.c.b16 %v786, %v782
    %v1063 = vpack.c.b16 %v787, %v783
    %v1064 = vpack.c.b16 %v788, %v784
    %v1065 = vpack.c.b16 %v793, %v789
    %v1066 = vpack.c.b16 %v794, %v790
    %v1067 = vpack.c.b16 %v795, %v791
    %v1068 = vpack.c.b16 %v796, %v792
    %v1069 = vpack.c.b16 %v801, %v797
    %v1070 = vpack.c.b16 %v802, %v798
    %v1071 = vpack.c.b16 %v803, %v799
    %v1072 = vpack.c.b16 %v804, %v800
    %v1073 = vpack.c.b16 %v809, %v805
    %v1074 = vpack.c.b16 %v810, %v806
    %v1075 = vpack.c.b16 %v811, %v807
    %v1076 = vpack.c.b16 %v812, %v808
    %v1077 = vpack.c.b16 %v817, %v813
    %v1078 = vpack.c.b16 %v818, %v814
    %v1079 = vpack.c.b16 %v819, %v815
    %v1080 = vpack.c.b16 %v820, %v816
    %v1081 = vpack.c.b16 %v825, %v821
    %v1082 = vpack.c.b16 %v826, %v822
    %v1083 = vpack.c.b16 %v827, %v823
    %v1084 = vpack.c.b16 %v828, %v824
    %v1085 = vpack.c.b16 %v833, %v829
    %v1086 = vpack.c.b16 %v834, %v830
    %v1087 = vpack.c.b16 %v835, %v831
    %v1088 = vpack.c.b16 %v836, %v832
    %v1089 = vpack.c.b16 %v841, %v837
    %v1090 = vpack.c.b16 %v842, %v838
    %v1091 = vpack.c.b16 %v843, %v839
    %v1092 = vpack.c.b16 %v844, %v840
    %v1093 = vpack.c.b16 %v849, %v845
    %v1094 = vpack.c.b16 %v850, %v846
    %v1095 = vpack.c.b16 %v851, %v847
    %v1096 = vpack.c.b16 %v852, %v848
    %v1097 = vpack.c.b16 %v857, %v853
    %v1098 = vpack.c.b16 %v858, %v854
    %v1099 = vpack.c.b16 %v859, %v855
    %v1100 = vpack.c.b16 %v860, %v856
    %v1101 = vpack.c.b16 %v865, %v861
    %v1102 = vpack.c.b16 %v866, %v862
    %v1103 = vpack.c.b16 %v867, %v863
    %v1104 = vpack.c.b16 %v868, %v864
    %v1105 = vpack.c.b16 %v873, %v869
    %v1106 = vpack.c.b16 %v874, %v870
    %v1107 = vpack.c.b16 %v875, %v871
    %v1108 = vpack.c.b16 %v876, %v872
    %v1109 = vpack.c.b16 %v881, %v877
    %v1110 = vpack.c.b16 %v882, %v878
    %v1111 = vpack.c.b16 %v883, %v879
    %v1112 = vpack.c.b16 %v884, %v880
    %v1113 = vpack.c.b16 %v889, %v885
    %v1114 = vpack.c.b16 %v890, %v886
    %v1115 = vpack.c.b16 %v891, %v887
    %v1116 = vpack.c.b16 %v892, %v888
    %v1117 = vpack.c.b16 %v897, %v893
    %v1118 = vpack.c.b16 %v898, %v894
    %v1119 = vpack.c.b16 %v899, %v895
    %v1120 = vpack.c.b16 %v900, %v896
    %v1121 = vpack.c.b16 %v905, %v901
    %v1122 = vpack.c.b16 %v906, %v902
    %v1123 = vpack.c.b16 %v907, %v903
    %v1124 = vpack.c.b16 %v908, %v904
    %v1125 = vpack.c.b16 %v913, %v909
    %v1126 = vpack.c.b16 %v914, %v910
    %v1127 = vpack.c.b16 %v915, %v911
    %v1128 = vpack.c.b16 %v916, %v912
    %v1129 = vpack.c.b16 %v921, %v917
    %v1130 = vpack.c.b16 %v922, %v918
    %v1131 = vpack.c.b16 %v923, %v919
    %v1132 = vpack.c.b16 %v924, %v920
    %v1133 = vpack.c.b16 %v929, %v925
    %v1134 = vpack.c.b16 %v930, %v926
    %v1135 = vpack.c.b16 %v931, %v927
    %v1136 = vpack.c.b16 %v932, %v928
    %v1137 = vpack.c.b16 %v937, %v933
    %v1138 = vpack.c.b16 %v938, %v934
    %v1139 = vpack.c.b16 %v939, %v935
    %v1140 = vpack.c.b16 %v940, %v936
    %v1141 = vpack.c.b16 %v945, %v941
    %v1142 = vpack.c.b16 %v946, %v942
    %v1143 = vpack.c.b16 %v947, %v943
    %v1144 = vpack.c.b16 %v948, %v944
    %vm1341 = vcmask 130048
    %v1343 = vsel %vm1341, %v142, 0
    %1345 = vmatprep.subr.bf16.mxu0 %v950
    %1346 = vmatpush1.bf16.msra.mxu0 %v949
    %1347 = vmatprep.subr.bf16.mxu0 %v954
    %1348 = vmatpush1.bf16.msra.mxu0 %v953
    %1349 = vmatprep.subr.bf16.mxu0 %v958
    %1350 = vmatpush1.bf16.msra.mxu0 %v957
    %1351 = vmatprep.subr.bf16.mxu0 %v962
    %1352 = vmatpush1.bf16.msra.mxu0 %v961
    %1353 = vmatprep.subr.bf16.mxu0 %v966
    %1354 = vmatpush1.bf16.msra.mxu0 %v965
    %1355 = vmatprep.subr.bf16.mxu0 %v970
    %1356 = vmatpush1.bf16.msra.mxu0 %v969
    %1357 = vmatprep.subr.bf16.mxu0 %v974
    %1358 = vmatpush1.bf16.msra.mxu0 %v973
    %1359 = vmatprep.subr.bf16.mxu0 %v978
    %1360 = vmatpush1.bf16.msra.mxu0 %v977
    %1361 = vmatprep.subr.bf16.mxu0 %v982
    %1362 = vmatpush1.bf16.msra.mxu0 %v981
    %1363 = vmatprep.subr.bf16.mxu0 %v986
    %1364 = vmatpush1.bf16.msra.mxu0 %v985
    %1365 = vmatprep.subr.bf16.mxu0 %v990
    %1366 = vmatpush1.bf16.msra.mxu0 %v989
    %1367 = vmatprep.subr.bf16.mxu0 %v994
    %1368 = vmatpush1.bf16.msra.mxu0 %v993
    %1369 = vmatprep.subr.bf16.mxu0 %v998
    %1370 = vmatpush1.bf16.msra.mxu0 %v997
    %1371 = vmatprep.subr.bf16.mxu0 %v1002
    %1372 = vmatpush1.bf16.msra.mxu0 %v1001
    %1373 = vmatprep.subr.bf16.mxu0 %v1006
    %1374 = vmatpush1.bf16.msra.mxu0 %v1005
    %1375 = vmatprep.subr.bf16.mxu0 %v1010
    %1376 = vmatpush1.bf16.msra.mxu0 %v1009
    %1377 = vmatprep.mubr.bf16.mxu0 %v137
    %1378 = vmatmul.mubr.bf16.gmra.mrb[0].mxu0 %v136
    %v1379 = vpop.f32.mrb[0].mxu0
    %v1380 = vadd.f32 %v344, %v1379
    %v1381 = vpop.f32.mrb[0].mxu0
    %v1382 = vadd.f32 %v348, %v1381
    %v1383 = vpop.f32.mrb[0].mxu0
    %v1384 = vadd.f32 %v344, %v1383
    %v1385 = vpop.f32.mrb[0].mxu0
    %v1386 = vadd.f32 %v348, %v1385
    %1387 = vdwg.mxu0
    %1388 = vmatprep.subr.bf16.mxu0 %v1014
    %1389 = vmatpush1.bf16.msra.mxu0 %v1013
    %1390 = vmatprep.subr.bf16.mxu0 %v1018
    %1391 = vmatpush1.bf16.msra.mxu0 %v1017
    %1392 = vmatprep.subr.bf16.mxu0 %v1022
    %1393 = vmatpush1.bf16.msra.mxu0 %v1021
    %1394 = vmatprep.subr.bf16.mxu0 %v1026
    %1395 = vmatpush1.bf16.msra.mxu0 %v1025
    %1396 = vmatprep.subr.bf16.mxu0 %v1030
    %1397 = vmatpush1.bf16.msra.mxu0 %v1029
    %1398 = vmatprep.subr.bf16.mxu0 %v1034
    %1399 = vmatpush1.bf16.msra.mxu0 %v1033
    %1400 = vmatprep.subr.bf16.mxu0 %v1038
    %1401 = vmatpush1.bf16.msra.mxu0 %v1037
    %1402 = vmatprep.subr.bf16.mxu0 %v1042
    %1403 = vmatpush1.bf16.msra.mxu0 %v1041
    %1404 = vmatprep.subr.bf16.mxu0 %v1046
    %1405 = vmatpush1.bf16.msra.mxu0 %v1045
    %1406 = vmatprep.subr.bf16.mxu0 %v1050
    %1407 = vmatpush1.bf16.msra.mxu0 %v1049
    %1408 = vmatprep.subr.bf16.mxu0 %v1054
    %1409 = vmatpush1.bf16.msra.mxu0 %v1053
    %1410 = vmatprep.subr.bf16.mxu0 %v1058
    %1411 = vmatpush1.bf16.msra.mxu0 %v1057
    %1412 = vmatprep.subr.bf16.mxu0 %v1062
    %1413 = vmatpush1.bf16.msra.mxu0 %v1061
    %1414 = vmatprep.subr.bf16.mxu0 %v1066
    %1415 = vmatpush1.bf16.msra.mxu0 %v1065
    %1416 = vmatprep.subr.bf16.mxu0 %v1070
    %1417 = vmatpush1.bf16.msra.mxu0 %v1069
    %1418 = vmatprep.subr.bf16.mxu0 %v1074
    %1419 = vmatpush1.bf16.msra.mxu0 %v1073
    %1420 = vmatprep.mubr.bf16.mxu0 %v139
    %1421 = vmatmul.mubr.bf16.gmra.mrb[0].mxu0 %v138
    %v1422 = vpop.f32.mrb[0].mxu0
    %v1423 = vadd.f32 %v1380, %v1422
    %v1424 = vpop.f32.mrb[0].mxu0
    %v1425 = vadd.f32 %v1382, %v1424
    %v1426 = vpop.f32.mrb[0].mxu0
    %v1427 = vadd.f32 %v1384, %v1426
    %v1428 = vpop.f32.mrb[0].mxu0
    %v1429 = vadd.f32 %v1386, %v1428
    %1430 = vdwg.mxu0
    %1431 = vmatprep.subr.bf16.mxu0 %v1078
    %1432 = vmatpush1.bf16.msra.mxu0 %v1077
    %1433 = vmatprep.subr.bf16.mxu0 %v1082
    %1434 = vmatpush1.bf16.msra.mxu0 %v1081
    %1435 = vmatprep.subr.bf16.mxu0 %v1086
    %1436 = vmatpush1.bf16.msra.mxu0 %v1085
    %1437 = vmatprep.subr.bf16.mxu0 %v1090
    %1438 = vmatpush1.bf16.msra.mxu0 %v1089
    %1439 = vmatprep.subr.bf16.mxu0 %v1094
    %1440 = vmatpush1.bf16.msra.mxu0 %v1093
    %1441 = vmatprep.subr.bf16.mxu0 %v1098
    %1442 = vmatpush1.bf16.msra.mxu0 %v1097
    %1443 = vmatprep.subr.bf16.mxu0 %v1102
    %1444 = vmatpush1.bf16.msra.mxu0 %v1101
    %1445 = vmatprep.subr.bf16.mxu0 %v1106
    %1446 = vmatpush1.bf16.msra.mxu0 %v1105
    %1447 = vmatprep.subr.bf16.mxu0 %v1110
    %1448 = vmatpush1.bf16.msra.mxu0 %v1109
    %1449 = vmatprep.subr.bf16.mxu0 %v1114
    %1450 = vmatpush1.bf16.msra.mxu0 %v1113
    %1451 = vmatprep.subr.bf16.mxu0 %v1118
    %1452 = vmatpush1.bf16.msra.mxu0 %v1117
    %1453 = vmatprep.subr.bf16.mxu0 %v1122
    %1454 = vmatpush1.bf16.msra.mxu0 %v1121
    %1455 = vmatprep.subr.bf16.mxu0 %v1126
    %1456 = vmatpush1.bf16.msra.mxu0 %v1125
    %1457 = vmatprep.subr.bf16.mxu0 %v1130
    %1458 = vmatpush1.bf16.msra.mxu0 %v1129
    %1459 = vmatprep.subr.bf16.mxu0 %v1134
    %1460 = vmatpush1.bf16.msra.mxu0 %v1133
    %1461 = vmatprep.subr.bf16.mxu0 %v1138
    %1462 = vmatpush1.bf16.msra.mxu0 %v1137
    %1463 = vmatprep.mubr.bf16.mxu0 %v141
    %1464 = vmatmul.mubr.bf16.gmra.mrb[0].mxu0 %v140
    %v1465 = vpop.f32.mrb[0].mxu0
    %v1466 = vadd.f32 %v1423, %v1465
    %v1467 = vpop.f32.mrb[0].mxu0
    %v1468 = vadd.f32 %v1425, %v1467
    %v1469 = vpop.f32.mrb[0].mxu0
    %v1470 = vadd.f32 %v1427, %v1469
    %v1471 = vpop.f32.mrb[0].mxu0
    %v1472 = vadd.f32 %v1429, %v1471
    %1473 = vdwg.mxu0
    %1474 = vmatprep.subr.bf16.mxu0 %v1142
    %1475 = vmatpush1.bf16.msra.mxu0 %v1141
    %1476 = vmatprep.subr.bf16.mxu0 0
    %1477 = vmatpush1.bf16.msra.mxu0 0
    %1478 = vmatprep.subr.bf16.mxu0 0
    %1479 = vmatpush1.bf16.msra.mxu0 0
    %1480 = vmatprep.subr.bf16.mxu0 0
    %1481 = vmatpush1.bf16.msra.mxu0 0
    %1482 = vmatprep.subr.bf16.mxu0 0
    %1483 = vmatpush1.bf16.msra.mxu0 0
    %1484 = vmatprep.subr.bf16.mxu0 0
    %1485 = vmatpush1.bf16.msra.mxu0 0
    %1486 = vmatprep.subr.bf16.mxu0 0
    %1487 = vmatpush1.bf16.msra.mxu0 0
    %1488 = vmatprep.subr.bf16.mxu0 0
    %1489 = vmatpush1.bf16.msra.mxu0 0
    %1490 = vmatprep.subr.bf16.mxu0 0
    %1491 = vmatpush1.bf16.msra.mxu0 0
    %1492 = vmatprep.subr.bf16.mxu0 0
    %1493 = vmatpush1.bf16.msra.mxu0 0
    %1494 = vmatprep.subr.bf16.mxu0 0
    %1495 = vmatpush1.bf16.msra.mxu0 0
    %1496 = vmatprep.subr.bf16.mxu0 0
    %1497 = vmatpush1.bf16.msra.mxu0 0
    %1498 = vmatprep.subr.bf16.mxu0 0
    %1499 = vmatpush1.bf16.msra.mxu0 0
    %1500 = vmatprep.subr.bf16.mxu0 0
    %1501 = vmatpush1.bf16.msra.mxu0 0
    %1502 = vmatprep.subr.bf16.mxu0 0
    %1503 = vmatpush1.bf16.msra.mxu0 0
    %1504 = vmatprep.subr.bf16.mxu0 0
    %1505 = vmatpush1.bf16.msra.mxu0 0
    %1506 = vmatprep.mubr.bf16.mxu0 0
    %1507 = vmatmul.mubr.bf16.gmra.mrb[0].mxu0 %v1343
    %v1508 = vpop.f32.mrb[0].mxu0
    %v1509 = vadd.f32 %v1466, %v1508
    %v1510 = vpop.f32.mrb[0].mxu0
    %v1511 = vadd.f32 %v1468, %v1510
    %v1512 = vpop.f32.mrb[0].mxu0
    %v1513 = vadd.f32 %v1470, %v1512
    %v1514 = vpop.f32.mrb[0].mxu0
    %v1515 = vadd.f32 %v1472, %v1514
    %1516 = vdwg.mxu0
    %1517 = vmatprep.subr.bf16.mxu0 %v952
    %1518 = vmatpush1.bf16.msra.mxu0 %v951
    %1519 = vmatprep.subr.bf16.mxu0 %v956
    %1520 = vmatpush1.bf16.msra.mxu0 %v955
    %1521 = vmatprep.subr.bf16.mxu0 %v960
    %1522 = vmatpush1.bf16.msra.mxu0 %v959
    %1523 = vmatprep.subr.bf16.mxu0 %v964
    %1524 = vmatpush1.bf16.msra.mxu0 %v963
    %1525 = vmatprep.subr.bf16.mxu0 %v968
    %1526 = vmatpush1.bf16.msra.mxu0 %v967
    %1527 = vmatprep.subr.bf16.mxu0 %v972
    %1528 = vmatpush1.bf16.msra.mxu0 %v971
    %1529 = vmatprep.subr.bf16.mxu0 %v976
    %1530 = vmatpush1.bf16.msra.mxu0 %v975
    %1531 = vmatprep.subr.bf16.mxu0 %v980
    %1532 = vmatpush1.bf16.msra.mxu0 %v979
    %1533 = vmatprep.subr.bf16.mxu0 %v984
    %1534 = vmatpush1.bf16.msra.mxu0 %v983
    %1535 = vmatprep.subr.bf16.mxu0 %v988
    %1536 = vmatpush1.bf16.msra.mxu0 %v987
    %1537 = vmatprep.subr.bf16.mxu0 %v992
    %1538 = vmatpush1.bf16.msra.mxu0 %v991
    %1539 = vmatprep.subr.bf16.mxu0 %v996
    %1540 = vmatpush1.bf16.msra.mxu0 %v995
    %1541 = vmatprep.subr.bf16.mxu0 %v1000
    %1542 = vmatpush1.bf16.msra.mxu0 %v999
    %1543 = vmatprep.subr.bf16.mxu0 %v1004
    %1544 = vmatpush1.bf16.msra.mxu0 %v1003
    %1545 = vmatprep.subr.bf16.mxu0 %v1008
    %1546 = vmatpush1.bf16.msra.mxu0 %v1007
    %1547 = vmatprep.subr.bf16.mxu0 %v1012
    %1548 = vmatpush1.bf16.msra.mxu0 %v1011
    %1549 = vmatprep.mubr.bf16.mxu0 %v137
    %1550 = vmatmul.mubr.bf16.gmra.mrb[0].mxu0 %v136
    %v1551 = vpop.f32.mrb[0].mxu0
    %v1552 = vadd.f32 %v352, %v1551
    %v1553 = vpop.f32.mrb[0].mxu0
    %v1554 = vadd.f32 %v356, %v1553
    %v1555 = vpop.f32.mrb[0].mxu0
    %v1556 = vadd.f32 %v352, %v1555
    %v1557 = vpop.f32.mrb[0].mxu0
    %v1558 = vadd.f32 %v356, %v1557
    %1559 = vdwg.mxu0
    %1560 = vmatprep.subr.bf16.mxu0 %v1016
    %1561 = vmatpush1.bf16.msra.mxu0 %v1015
    %1562 = vmatprep.subr.bf16.mxu0 %v1020
    %1563 = vmatpush1.bf16.msra.mxu0 %v1019
    %1564 = vmatprep.subr.bf16.mxu0 %v1024
    %1565 = vmatpush1.bf16.msra.mxu0 %v1023
    %1566 = vmatprep.subr.bf16.mxu0 %v1028
    %1567 = vmatpush1.bf16.msra.mxu0 %v1027
    %1568 = vmatprep.subr.bf16.mxu0 %v1032
    %1569 = vmatpush1.bf16.msra.mxu0 %v1031
    %1570 = vmatprep.subr.bf16.mxu0 %v1036
    %1571 = vmatpush1.bf16.msra.mxu0 %v1035
    %1572 = vmatprep.subr.bf16.mxu0 %v1040
    %1573 = vmatpush1.bf16.msra.mxu0 %v1039
    %1574 = vmatprep.subr.bf16.mxu0 %v1044
    %1575 = vmatpush1.bf16.msra.mxu0 %v1043
    %1576 = vmatprep.subr.bf16.mxu0 %v1048
    %1577 = vmatpush1.bf16.msra.mxu0 %v1047
    %1578 = vmatprep.subr.bf16.mxu0 %v1052
    %1579 = vmatpush1.bf16.msra.mxu0 %v1051
    %1580 = vmatprep.subr.bf16.mxu0 %v1056
    %1581 = vmatpush1.bf16.msra.mxu0 %v1055
    %1582 = vmatprep.subr.bf16.mxu0 %v1060
    %1583 = vmatpush1.bf16.msra.mxu0 %v1059
    %1584 = vmatprep.subr.bf16.mxu0 %v1064
    %1585 = vmatpush1.bf16.msra.mxu0 %v1063
    %1586 = vmatprep.subr.bf16.mxu0 %v1068
    %1587 = vmatpush1.bf16.msra.mxu0 %v1067
    %1588 = vmatprep.subr.bf16.mxu0 %v1072
    %1589 = vmatpush1.bf16.msra.mxu0 %v1071
    %1590 = vmatprep.subr.bf16.mxu0 %v1076
    %1591 = vmatpush1.bf16.msra.mxu0 %v1075
    %1592 = vmatprep.mubr.bf16.mxu0 %v139
    %1593 = vmatmul.mubr.bf16.gmra.mrb[0].mxu0 %v138
    %v1594 = vpop.f32.mrb[0].mxu0
    %v1595 = vadd.f32 %v1552, %v1594
    %v1596 = vpop.f32.mrb[0].mxu0
    %v1597 = vadd.f32 %v1554, %v1596
    %v1598 = vpop.f32.mrb[0].mxu0
    %v1599 = vadd.f32 %v1556, %v1598
    %v1600 = vpop.f32.mrb[0].mxu0
    %v1601 = vadd.f32 %v1558, %v1600
    %1602 = vdwg.mxu0
    %1603 = vmatprep.subr.bf16.mxu0 %v1080
    %1604 = vmatpush1.bf16.msra.mxu0 %v1079
    %1605 = vmatprep.subr.bf16.mxu0 %v1084
    %1606 = vmatpush1.bf16.msra.mxu0 %v1083
    %1607 = vmatprep.subr.bf16.mxu0 %v1088
    %1608 = vmatpush1.bf16.msra.mxu0 %v1087
    %1609 = vmatprep.subr.bf16.mxu0 %v1092
    %1610 = vmatpush1.bf16.msra.mxu0 %v1091
    %1611 = vmatprep.subr.bf16.mxu0 %v1096
    %1612 = vmatpush1.bf16.msra.mxu0 %v1095
    %1613 = vmatprep.subr.bf16.mxu0 %v1100
    %1614 = vmatpush1.bf16.msra.mxu0 %v1099
    %1615 = vmatprep.subr.bf16.mxu0 %v1104
    %1616 = vmatpush1.bf16.msra.mxu0 %v1103
    %1617 = vmatprep.subr.bf16.mxu0 %v1108
    %1618 = vmatpush1.bf16.msra.mxu0 %v1107
    %1619 = vmatprep.subr.bf16.mxu0 %v1112
    %1620 = vmatpush1.bf16.msra.mxu0 %v1111
    %1621 = vmatprep.subr.bf16.mxu0 %v1116
    %1622 = vmatpush1.bf16.msra.mxu0 %v1115
    %1623 = vmatprep.subr.bf16.mxu0 %v1120
    %1624 = vmatpush1.bf16.msra.mxu0 %v1119
    %1625 = vmatprep.subr.bf16.mxu0 %v1124
    %1626 = vmatpush1.bf16.msra.mxu0 %v1123
    %1627 = vmatprep.subr.bf16.mxu0 %v1128
    %1628 = vmatpush1.bf16.msra.mxu0 %v1127
    %1629 = vmatprep.subr.bf16.mxu0 %v1132
    %1630 = vmatpush1.bf16.msra.mxu0 %v1131
    %1631 = vmatprep.subr.bf16.mxu0 %v1136
    %1632 = vmatpush1.bf16.msra.mxu0 %v1135
    %1633 = vmatprep.subr.bf16.mxu0 %v1140
    %1634 = vmatpush1.bf16.msra.mxu0 %v1139
    %1635 = vmatprep.mubr.bf16.mxu0 %v141
    %1636 = vmatmul.mubr.bf16.gmra.mrb[0].mxu0 %v140
    %v1637 = vpop.f32.mrb[0].mxu0
    %v1638 = vadd.f32 %v1595, %v1637
    %v1639 = vpop.f32.mrb[0].mxu0
    %v1640 = vadd.f32 %v1597, %v1639
    %v1641 = vpop.f32.mrb[0].mxu0
    %v1642 = vadd.f32 %v1599, %v1641
    %v1643 = vpop.f32.mrb[0].mxu0
    %v1644 = vadd.f32 %v1601, %v1643
    %1645 = vdwg.mxu0
    %1646 = vmatprep.subr.bf16.mxu0 %v1144
    %1647 = vmatpush1.bf16.msra.mxu0 %v1143
    %1648 = vmatprep.subr.bf16.mxu0 0
    %1649 = vmatpush1.bf16.msra.mxu0 0
    %1650 = vmatprep.subr.bf16.mxu0 0
    %1651 = vmatpush1.bf16.msra.mxu0 0
    %1652 = vmatprep.subr.bf16.mxu0 0
    %1653 = vmatpush1.bf16.msra.mxu0 0
    %1654 = vmatprep.subr.bf16.mxu0 0
    %1655 = vmatpush1.bf16.msra.mxu0 0
    %1656 = vmatprep.subr.bf16.mxu0 0
    %1657 = vmatpush1.bf16.msra.mxu0 0
    %1658 = vmatprep.subr.bf16.mxu0 0
    %1659 = vmatpush1.bf16.msra.mxu0 0
    %1660 = vmatprep.subr.bf16.mxu0 0
    %1661 = vmatpush1.bf16.msra.mxu0 0
    %1662 = vmatprep.subr.bf16.mxu0 0
    %1663 = vmatpush1.bf16.msra.mxu0 0
    %1664 = vmatprep.subr.bf16.mxu0 0
    %1665 = vmatpush1.bf16.msra.mxu0 0
    %1666 = vmatprep.subr.bf16.mxu0 0
    %1667 = vmatpush1.bf16.msra.mxu0 0
    %1668 = vmatprep.subr.bf16.mxu0 0
    %1669 = vmatpush1.bf16.msra.mxu0 0
    %1670 = vmatprep.subr.bf16.mxu0 0
    %1671 = vmatpush1.bf16.msra.mxu0 0
    %1672 = vmatprep.subr.bf16.mxu0 0
    %1673 = vmatpush1.bf16.msra.mxu0 0
    %1674 = vmatprep.subr.bf16.mxu0 0
    %1675 = vmatpush1.bf16.msra.mxu0 0
    %1676 = vmatprep.subr.bf16.mxu0 0
    %1677 = vmatpush1.bf16.msra.mxu0 0
    %1678 = vmatprep.mubr.bf16.mxu0 0
    %1679 = vmatmul.mubr.bf16.gmra.mrb[0].mxu0 %v1343
    %v1680 = vpop.f32.mrb[0].mxu0
    %v1681 = vadd.f32 %v1638, %v1680
    %v1682 = vpop.f32.mrb[0].mxu0
    %v1683 = vadd.f32 %v1640, %v1682
    %v1684 = vpop.f32.mrb[0].mxu0
    %v1685 = vadd.f32 %v1642, %v1684
    %v1686 = vpop.f32.mrb[0].mxu0
    %v1687 = vadd.f32 %v1644, %v1686
    %1688 = vdwg.mxu0
    %v1689 = vmax.f32 %v1509, 0.0
    %v1690 = vmax.f32 %v1511, 0.0
    %v1691 = vmax.f32 %v1681, 0.0
    %v1692 = vmax.f32 %v1683, 0.0
    %v1693 = vmax.f32 %v1513, 0.0
    %v1694 = vmax.f32 %v1515, 0.0
    %v1695 = vmax.f32 %v1685, 0.0
    %v1696 = vmax.f32 %v1687, 0.0
    %v1697 = vpack.c.bf16 %v1693, %v1689
    %v1698 = vpack.c.bf16 %v1694, %v1690
    %v1699 = vpack.c.bf16 %v1695, %v1691
    %v1700 = vpack.c.bf16 %v1696, %v1692
    %v1701 = vld [vmem:[#allocation8] sm:$0xff]
    %v1702 = vld [vmem:[#allocation8 + $0x8] sm:$0xff]
    %v1703 = vld [vmem:[#allocation8 + $0x10] sm:$0xff]
    %v1704 = vld [vmem:[#allocation8 + $0x18] sm:$0xff]
    %v1705 = vld [vmem:[#allocation8 + $0x20] sm:$0xff]
    %v1706 = vld [vmem:[#allocation8 + $0x28] sm:$0xff]
    %v1707 = vld [vmem:[#allocation8 + $0x30] sm:$0xff]
    %v1708 = vld [vmem:[#allocation8 + $0x38] sm:$0xff]
    %v1709 = vld [vmem:[#allocation8 + $0x40] sm:$0xff]
    %v1710 = vld [vmem:[#allocation8 + $0x48] sm:$0xff]
    %v1711 = vld [vmem:[#allocation8 + $0x50] sm:$0xff]
    %v1712 = vld [vmem:[#allocation8 + $0x58] sm:$0xff]
    %v1713 = vld [vmem:[#allocation8 + $0x60] sm:$0xff]
    %v1714 = vld [vmem:[#allocation8 + $0x68] sm:$0xff]
    %v1715 = vld [vmem:[#allocation8 + $0x70] sm:$0xff]
    %v1716 = vld [vmem:[#allocation8 + $0x78] sm:$0xff]
    %v1717 = vld [vmem:[#allocation8 + $0x80] sm:$0xff]
    %v1718 = vld [vmem:[#allocation8 + $0x88] sm:$0xff]
    %v1719 = vld [vmem:[#allocation8 + $0x90] sm:$0xff]
    %v1720 = vld [vmem:[#allocation8 + $0x98] sm:$0xff]
    %v1721 = vld [vmem:[#allocation8 + $0xa0] sm:$0xff]
    %v1722 = vld [vmem:[#allocation8 + $0xa8] sm:$0xff]
    %v1723 = vld [vmem:[#allocation8 + $0xb0] sm:$0xff]
    %v1724 = vld [vmem:[#allocation8 + $0xb8] sm:$0xff]
    %v1725 = vld [vmem:[#allocation8 + $0xc0] sm:$0xff]
    %v1726 = vld [vmem:[#allocation8 + $0xc8] sm:$0xff]
    %v1727 = vld [vmem:[#allocation8 + $0xd0] sm:$0xff]
    %v1728 = vld [vmem:[#allocation8 + $0xd8] sm:$0xff]
    %v1729 = vld [vmem:[#allocation8 + $0xe0] sm:$0xff]
    %v1730 = vld [vmem:[#allocation8 + $0xe8] sm:$0xff]
    %v1731 = vld [vmem:[#allocation8 + $0xf0] sm:$0xff]
    %v1732 = vld [vmem:[#allocation8 + $0xf8] sm:$0xff]
    %v1733 = vld [vmem:[#allocation8 + $0x100] sm:$0xff]
    %v1734 = vld [vmem:[#allocation8 + $0x108] sm:$0xff]
    %v1735 = vld [vmem:[#allocation8 + $0x110] sm:$0xff]
    %v1736 = vld [vmem:[#allocation8 + $0x118] sm:$0xff]
    %v1737 = vld [vmem:[#allocation8 + $0x120] sm:$0xff]
    %v1738 = vld [vmem:[#allocation8 + $0x128] sm:$0xff]
    %v1739 = vld [vmem:[#allocation8 + $0x130] sm:$0xff]
    %v1740 = vld [vmem:[#allocation8 + $0x138] sm:$0xff]
    %v1741 = vld [vmem:[#allocation8 + $0x140] sm:$0xff]
    %v1742 = vld [vmem:[#allocation8 + $0x148] sm:$0xff]
    %v1743 = vld [vmem:[#allocation8 + $0x150] sm:$0xff]
    %v1744 = vld [vmem:[#allocation8 + $0x158] sm:$0xff]
    %v1745 = vld [vmem:[#allocation8 + $0x160] sm:$0xff]
    %v1746 = vld [vmem:[#allocation8 + $0x168] sm:$0xff]
    %v1747 = vld [vmem:[#allocation8 + $0x170] sm:$0xff]
    %v1748 = vld [vmem:[#allocation8 + $0x178] sm:$0xff]
    %v1749 = vld [vmem:[#allocation8 + $0x180] sm:$0xff]
    %v1750 = vld [vmem:[#allocation8 + $0x188] sm:$0xff]
    %v1751 = vld [vmem:[#allocation8 + $0x190] sm:$0xff]
    %v1752 = vld [vmem:[#allocation8 + $0x198] sm:$0xff]
    %v1753 = vld [vmem:[#allocation8 + $0x1a0] sm:$0xff]
    %v1754 = vld [vmem:[#allocation8 + $0x1a8] sm:$0xff]
    %v1755 = vld [vmem:[#allocation8 + $0x1b0] sm:$0xff]
    %v1756 = vld [vmem:[#allocation8 + $0x1b8] sm:$0xff]
    %v1757 = vld [vmem:[#allocation8 + $0x1c0] sm:$0xff]
    %v1758 = vld [vmem:[#allocation8 + $0x1c8] sm:$0xff]
    %v1759 = vld [vmem:[#allocation8 + $0x1d0] sm:$0xff]
    %v1760 = vld [vmem:[#allocation8 + $0x1d8] sm:$0xff]
    %v1761 = vld [vmem:[#allocation8 + $0x1e0] sm:$0xff]
    %v1762 = vld [vmem:[#allocation8 + $0x1e8] sm:$0xff]
    %v1763 = vld [vmem:[#allocation8 + $0x1f0] sm:$0xff]
    %v1764 = vld [vmem:[#allocation8 + $0x1f8] sm:$0xff]
    %v1765 = vld [vmem:[%s4] sm:$0x3]
    %v1767 = vlaneseq
    %v1768 = vshrl.u32 %v1767, 7
    %v1769 = vsub.s32 0, %v1768
    %v1770 = vrot.slane %v1765, %v1769
    %v1771 = vlaneseq
    %v1772 = vshrl.u32 %v1771, 7
    %v1773 = vsub.s32 1, %v1772
    %v1774 = vrot.slane %v1765, %v1773
    %v1841 = vunpack.c.l.b16 %v1701
    %v1842 = vunpack.c.h.b16 %v1701
    %v1843 = vunpack.c.l.b16 %v1702
    %v1844 = vunpack.c.h.b16 %v1702
    %v1845 = vunpack.c.l.b16 %v1703
    %v1846 = vunpack.c.h.b16 %v1703
    %v1847 = vunpack.c.l.b16 %v1704
    %v1848 = vunpack.c.h.b16 %v1704
    %v1849 = vunpack.c.l.b16 %v1705
    %v1850 = vunpack.c.h.b16 %v1705
    %v1851 = vunpack.c.l.b16 %v1706
    %v1852 = vunpack.c.h.b16 %v1706
    %v1853 = vunpack.c.l.b16 %v1707
    %v1854 = vunpack.c.h.b16 %v1707
    %v1855 = vunpack.c.l.b16 %v1708
    %v1856 = vunpack.c.h.b16 %v1708
    %v1857 = vunpack.c.l.b16 %v1709
    %v1858 = vunpack.c.h.b16 %v1709
    %v1859 = vunpack.c.l.b16 %v1710
    %v1860 = vunpack.c.h.b16 %v1710
    %v1861 = vunpack.c.l.b16 %v1711
    %v1862 = vunpack.c.h.b16 %v1711
    %v1863 = vunpack.c.l.b16 %v1712
    %v1864 = vunpack.c.h.b16 %v1712
    %v1865 = vunpack.c.l.b16 %v1713
    %v1866 = vunpack.c.h.b16 %v1713
    %v1867 = vunpack.c.l.b16 %v1714
    %v1868 = vunpack.c.h.b16 %v1714
    %v1869 = vunpack.c.l.b16 %v1715
    %v1870 = vunpack.c.h.b16 %v1715
    %v1871 = vunpack.c.l.b16 %v1716
    %v1872 = vunpack.c.h.b16 %v1716
    %v1873 = vunpack.c.l.b16 %v1717
    %v1874 = vunpack.c.h.b16 %v1717
    %v1875 = vunpack.c.l.b16 %v1718
    %v1876 = vunpack.c.h.b16 %v1718
    %v1877 = vunpack.c.l.b16 %v1719
    %v1878 = vunpack.c.h.b16 %v1719
    %v1879 = vunpack.c.l.b16 %v1720
    %v1880 = vunpack.c.h.b16 %v1720
    %v1881 = vunpack.c.l.b16 %v1721
    %v1882 = vunpack.c.h.b16 %v1721
    %v1883 = vunpack.c.l.b16 %v1722
    %v1884 = vunpack.c.h.b16 %v1722
    %v1885 = vunpack.c.l.b16 %v1723
    %v1886 = vunpack.c.h.b16 %v1723
    %v1887 = vunpack.c.l.b16 %v1724
    %v1888 = vunpack.c.h.b16 %v1724
    %v1889 = vunpack.c.l.b16 %v1725
    %v1890 = vunpack.c.h.b16 %v1725
    %v1891 = vunpack.c.l.b16 %v1726
    %v1892 = vunpack.c.h.b16 %v1726
    %v1893 = vunpack.c.l.b16 %v1727
    %v1894 = vunpack.c.h.b16 %v1727
    %v1895 = vunpack.c.l.b16 %v1728
    %v1896 = vunpack.c.h.b16 %v1728
    %v1897 = vunpack.c.l.b16 %v1729
    %v1898 = vunpack.c.h.b16 %v1729
    %v1899 = vunpack.c.l.b16 %v1730
    %v1900 = vunpack.c.h.b16 %v1730
    %v1901 = vunpack.c.l.b16 %v1731
    %v1902 = vunpack.c.h.b16 %v1731
    %v1903 = vunpack.c.l.b16 %v1732
    %v1904 = vunpack.c.h.b16 %v1732
    %v1905 = vunpack.c.l.b16 %v1733
    %v1906 = vunpack.c.h.b16 %v1733
    %v1907 = vunpack.c.l.b16 %v1734
    %v1908 = vunpack.c.h.b16 %v1734
    %v1909 = vunpack.c.l.b16 %v1735
    %v1910 = vunpack.c.h.b16 %v1735
    %v1911 = vunpack.c.l.b16 %v1736
    %v1912 = vunpack.c.h.b16 %v1736
    %v1913 = vunpack.c.l.b16 %v1737
    %v1914 = vunpack.c.h.b16 %v1737
    %v1915 = vunpack.c.l.b16 %v1738
    %v1916 = vunpack.c.h.b16 %v1738
    %v1917 = vunpack.c.l.b16 %v1739
    %v1918 = vunpack.c.h.b16 %v1739
    %v1919 = vunpack.c.l.b16 %v1740
    %v1920 = vunpack.c.h.b16 %v1740
    %v1921 = vunpack.c.l.b16 %v1741
    %v1922 = vunpack.c.h.b16 %v1741
    %v1923 = vunpack.c.l.b16 %v1742
    %v1924 = vunpack.c.h.b16 %v1742
    %v1925 = vunpack.c.l.b16 %v1743
    %v1926 = vunpack.c.h.b16 %v1743
    %v1927 = vunpack.c.l.b16 %v1744
    %v1928 = vunpack.c.h.b16 %v1744
    %v1929 = vunpack.c.l.b16 %v1745
    %v1930 = vunpack.c.h.b16 %v1745
    %v1931 = vunpack.c.l.b16 %v1746
    %v1932 = vunpack.c.h.b16 %v1746
    %v1933 = vunpack.c.l.b16 %v1747
    %v1934 = vunpack.c.h.b16 %v1747
    %v1935 = vunpack.c.l.b16 %v1748
    %v1936 = vunpack.c.h.b16 %v1748
    %v1937 = vunpack.c.l.b16 %v1749
    %v1938 = vunpack.c.h.b16 %v1749
    %v1939 = vunpack.c.l.b16 %v1750
    %v1940 = vunpack.c.h.b16 %v1750
    %v1941 = vunpack.c.l.b16 %v1751
    %v1942 = vunpack.c.h.b16 %v1751
    %v1943 = vunpack.c.l.b16 %v1752
    %v1944 = vunpack.c.h.b16 %v1752
    %v1945 = vunpack.c.l.b16 %v1753
    %v1946 = vunpack.c.h.b16 %v1753
    %v1947 = vunpack.c.l.b16 %v1754
    %v1948 = vunpack.c.h.b16 %v1754
    %v1949 = vunpack.c.l.b16 %v1755
    %v1950 = vunpack.c.h.b16 %v1755
    %v1951 = vunpack.c.l.b16 %v1756
    %v1952 = vunpack.c.h.b16 %v1756
    %v1953 = vunpack.c.l.b16 %v1757
    %v1954 = vunpack.c.h.b16 %v1757
    %v1955 = vunpack.c.l.b16 %v1758
    %v1956 = vunpack.c.h.b16 %v1758
    %v1957 = vunpack.c.l.b16 %v1759
    %v1958 = vunpack.c.h.b16 %v1759
    %v1959 = vunpack.c.l.b16 %v1760
    %v1960 = vunpack.c.h.b16 %v1760
    %v1961 = vunpack.c.l.b16 %v1761
    %v1962 = vunpack.c.h.b16 %v1761
    %v1963 = vunpack.c.l.b16 %v1762
    %v1964 = vunpack.c.h.b16 %v1762
    %v1965 = vunpack.c.l.b16 %v1763
    %v1966 = vunpack.c.h.b16 %v1763
    %v1967 = vunpack.c.l.b16 %v1764
    %v1968 = vunpack.c.h.b16 %v1764
    %v1969 = vpack.c.b16 %v1843, %v1841
    %v1970 = vpack.c.b16 %v1844, %v1842
    %v1971 = vpack.c.b16 %v1847, %v1845
    %v1972 = vpack.c.b16 %v1848, %v1846
    %v1973 = vpack.c.b16 %v1851, %v1849
    %v1974 = vpack.c.b16 %v1852, %v1850
    %v1975 = vpack.c.b16 %v1855, %v1853
    %v1976 = vpack.c.b16 %v1856, %v1854
    %v1977 = vpack.c.b16 %v1859, %v1857
    %v1978 = vpack.c.b16 %v1860, %v1858
    %v1979 = vpack.c.b16 %v1863, %v1861
    %v1980 = vpack.c.b16 %v1864, %v1862
    %v1981 = vpack.c.b16 %v1867, %v1865
    %v1982 = vpack.c.b16 %v1868, %v1866
    %v1983 = vpack.c.b16 %v1871, %v1869
    %v1984 = vpack.c.b16 %v1872, %v1870
    %v1985 = vpack.c.b16 %v1875, %v1873
    %v1986 = vpack.c.b16 %v1876, %v1874
    %v1987 = vpack.c.b16 %v1879, %v1877
    %v1988 = vpack.c.b16 %v1880, %v1878
    %v1989 = vpack.c.b16 %v1883, %v1881
    %v1990 = vpack.c.b16 %v1884, %v1882
    %v1991 = vpack.c.b16 %v1887, %v1885
    %v1992 = vpack.c.b16 %v1888, %v1886
    %v1993 = vpack.c.b16 %v1891, %v1889
    %v1994 = vpack.c.b16 %v1892, %v1890
    %v1995 = vpack.c.b16 %v1895, %v1893
    %v1996 = vpack.c.b16 %v1896, %v1894
    %v1997 = vpack.c.b16 %v1899, %v1897
    %v1998 = vpack.c.b16 %v1900, %v1898
    %v1999 = vpack.c.b16 %v1903, %v1901
    %v2000 = vpack.c.b16 %v1904, %v1902
    %v2001 = vpack.c.b16 %v1907, %v1905
    %v2002 = vpack.c.b16 %v1908, %v1906
    %v2003 = vpack.c.b16 %v1911, %v1909
    %v2004 = vpack.c.b16 %v1912, %v1910
    %v2005 = vpack.c.b16 %v1915, %v1913
    %v2006 = vpack.c.b16 %v1916, %v1914
    %v2007 = vpack.c.b16 %v1919, %v1917
    %v2008 = vpack.c.b16 %v1920, %v1918
    %v2009 = vpack.c.b16 %v1923, %v1921
    %v2010 = vpack.c.b16 %v1924, %v1922
    %v2011 = vpack.c.b16 %v1927, %v1925
    %v2012 = vpack.c.b16 %v1928, %v1926
    %v2013 = vpack.c.b16 %v1931, %v1929
    %v2014 = vpack.c.b16 %v1932, %v1930
    %v2015 = vpack.c.b16 %v1935, %v1933
    %v2016 = vpack.c.b16 %v1936, %v1934
    %v2017 = vpack.c.b16 %v1939, %v1937
    %v2018 = vpack.c.b16 %v1940, %v1938
    %v2019 = vpack.c.b16 %v1943, %v1941
    %v2020 = vpack.c.b16 %v1944, %v1942
    %v2021 = vpack.c.b16 %v1947, %v1945
    %v2022 = vpack.c.b16 %v1948, %v1946
    %v2023 = vpack.c.b16 %v1951, %v1949
    %v2024 = vpack.c.b16 %v1952, %v1950
    %v2025 = vpack.c.b16 %v1955, %v1953
    %v2026 = vpack.c.b16 %v1956, %v1954
    %v2027 = vpack.c.b16 %v1959, %v1957
    %v2028 = vpack.c.b16 %v1960, %v1958
    %v2029 = vpack.c.b16 %v1963, %v1961
    %v2030 = vpack.c.b16 %v1964, %v1962
    %v2031 = vpack.c.b16 %v1967, %v1965
    %v2032 = vpack.c.b16 %v1968, %v1966
    %2097 = vmatprep.subr.bf16.mxu0 %v1970
    %2098 = vmatpush1.bf16.msra.mxu0 %v1969
    %2099 = vmatprep.subr.bf16.mxu0 %v1972
    %2100 = vmatpush1.bf16.msra.mxu0 %v1971
    %2101 = vmatprep.subr.bf16.mxu0 %v1974
    %2102 = vmatpush1.bf16.msra.mxu0 %v1973
    %2103 = vmatprep.subr.bf16.mxu0 %v1976
    %2104 = vmatpush1.bf16.msra.mxu0 %v1975
    %2105 = vmatprep.subr.bf16.mxu0 %v1978
    %2106 = vmatpush1.bf16.msra.mxu0 %v1977
    %2107 = vmatprep.subr.bf16.mxu0 %v1980
    %2108 = vmatpush1.bf16.msra.mxu0 %v1979
    %2109 = vmatprep.subr.bf16.mxu0 %v1982
    %2110 = vmatpush1.bf16.msra.mxu0 %v1981
    %2111 = vmatprep.subr.bf16.mxu0 %v1984
    %2112 = vmatpush1.bf16.msra.mxu0 %v1983
    %2113 = vmatprep.subr.bf16.mxu0 %v1986
    %2114 = vmatpush1.bf16.msra.mxu0 %v1985
    %2115 = vmatprep.subr.bf16.mxu0 %v1988
    %2116 = vmatpush1.bf16.msra.mxu0 %v1987
    %2117 = vmatprep.subr.bf16.mxu0 %v1990
    %2118 = vmatpush1.bf16.msra.mxu0 %v1989
    %2119 = vmatprep.subr.bf16.mxu0 %v1992
    %2120 = vmatpush1.bf16.msra.mxu0 %v1991
    %2121 = vmatprep.subr.bf16.mxu0 %v1994
    %2122 = vmatpush1.bf16.msra.mxu0 %v1993
    %2123 = vmatprep.subr.bf16.mxu0 %v1996
    %2124 = vmatpush1.bf16.msra.mxu0 %v1995
    %2125 = vmatprep.subr.bf16.mxu0 %v1998
    %2126 = vmatpush1.bf16.msra.mxu0 %v1997
    %2127 = vmatprep.subr.bf16.mxu0 %v2000
    %2128 = vmatpush1.bf16.msra.mxu0 %v1999
    %2129 = vmatprep.mubr.bf16.mxu0 %v1698
    %2130 = vmatmul.mubr.bf16.gmra.mrb[0].mxu0 %v1697
    %v2131 = vpop.f32.mrb[0].mxu0
    %v2132 = vadd.f32 %v1770, %v2131
    %v2133 = vpop.f32.mrb[0].mxu0
    %v2134 = vadd.f32 %v1774, %v2133
    %v2135 = vpop.f32.mrb[0].mxu0
    %v2136 = vadd.f32 %v1770, %v2135
    %v2137 = vpop.f32.mrb[0].mxu0
    %v2138 = vadd.f32 %v1774, %v2137
    %2139 = vdwg.mxu0
    %2140 = vmatprep.subr.bf16.mxu0 %v2002
    %2141 = vmatpush1.bf16.msra.mxu0 %v2001
    %2142 = vmatprep.subr.bf16.mxu0 %v2004
    %2143 = vmatpush1.bf16.msra.mxu0 %v2003
    %2144 = vmatprep.subr.bf16.mxu0 %v2006
    %2145 = vmatpush1.bf16.msra.mxu0 %v2005
    %2146 = vmatprep.subr.bf16.mxu0 %v2008
    %2147 = vmatpush1.bf16.msra.mxu0 %v2007
    %2148 = vmatprep.subr.bf16.mxu0 %v2010
    %2149 = vmatpush1.bf16.msra.mxu0 %v2009
    %2150 = vmatprep.subr.bf16.mxu0 %v2012
    %2151 = vmatpush1.bf16.msra.mxu0 %v2011
    %2152 = vmatprep.subr.bf16.mxu0 %v2014
    %2153 = vmatpush1.bf16.msra.mxu0 %v2013
    %2154 = vmatprep.subr.bf16.mxu0 %v2016
    %2155 = vmatpush1.bf16.msra.mxu0 %v2015
    %2156 = vmatprep.subr.bf16.mxu0 %v2018
    %2157 = vmatpush1.bf16.msra.mxu0 %v2017
    %2158 = vmatprep.subr.bf16.mxu0 %v2020
    %2159 = vmatpush1.bf16.msra.mxu0 %v2019
    %2160 = vmatprep.subr.bf16.mxu0 %v2022
    %2161 = vmatpush1.bf16.msra.mxu0 %v2021
    %2162 = vmatprep.subr.bf16.mxu0 %v2024
    %2163 = vmatpush1.bf16.msra.mxu0 %v2023
    %2164 = vmatprep.subr.bf16.mxu0 %v2026
    %2165 = vmatpush1.bf16.msra.mxu0 %v2025
    %2166 = vmatprep.subr.bf16.mxu0 %v2028
    %2167 = vmatpush1.bf16.msra.mxu0 %v2027
    %2168 = vmatprep.subr.bf16.mxu0 %v2030
    %2169 = vmatpush1.bf16.msra.mxu0 %v2029
    %2170 = vmatprep.subr.bf16.mxu0 %v2032
    %2171 = vmatpush1.bf16.msra.mxu0 %v2031
    %2172 = vmatprep.mubr.bf16.mxu0 %v1700
    %2173 = vmatmul.mubr.bf16.gmra.mrb[0].mxu0 %v1699
    %v2174 = vpop.f32.mrb[0].mxu0
    %v2175 = vadd.f32 %v2132, %v2174
    %v2176 = vpop.f32.mrb[0].mxu0
    %v2177 = vadd.f32 %v2134, %v2176
    %v2178 = vpop.f32.mrb[0].mxu0
    %v2179 = vadd.f32 %v2136, %v2178
    %v2180 = vpop.f32.mrb[0].mxu0
    %v2181 = vadd.f32 %v2138, %v2180
    %2182 = vdwg.mxu0
    %v2183 = vmax.f32 %v2175, 0.0
    %v2184 = vmax.f32 %v2177, 0.0
    %v2185 = vmax.f32 %v2179, 0.0
    %v2186 = vmax.f32 %v2181, 0.0
    %v2187 = vpack.c.bf16 %v2185, %v2183
    %v2188 = vpack.c.bf16 %v2186, %v2184
    %v2189 = vld [vmem:[%s5] sm:$0xf]
    %v2190 = vld [vmem:[%s5 + $0x4] sm:$0xf]
    %v2191 = vld [vmem:[%s5 + $0x8] sm:$0xf]
    %v2192 = vld [vmem:[%s5 + $0xc] sm:$0xf]
    %v2193 = vld [vmem:[%s5 + $0x10] sm:$0xf]
    %v2194 = vld [vmem:[%s5 + $0x14] sm:$0xf]
    %v2195 = vld [vmem:[%s5 + $0x18] sm:$0xf]
    %v2196 = vld [vmem:[%s5 + $0x1c] sm:$0xf]
    %v2197 = vld [vmem:[%s5 + $0x20] sm:$0xf]
    %v2198 = vld [vmem:[%s5 + $0x24] sm:$0xf]
    %v2199 = vld [vmem:[%s5 + $0x28] sm:$0xf]
    %v2200 = vld [vmem:[%s5 + $0x2c] sm:$0xf]
    %v2201 = vld [vmem:[%s5 + $0x30] sm:$0xf]
    %v2202 = vld [vmem:[%s5 + $0x34] sm:$0xf]
    %v2203 = vld [vmem:[%s5 + $0x38] sm:$0xf]
    %v2204 = vld [vmem:[%s5 + $0x3c] sm:$0xf]
    %v2205 = vld [vmem:[%s5 + $0x40] sm:$0xf]
    %v2206 = vld [vmem:[%s5 + $0x44] sm:$0xf]
    %v2207 = vld [vmem:[%s5 + $0x48] sm:$0xf]
    %v2208 = vld [vmem:[%s5 + $0x4c] sm:$0xf]
    %v2209 = vld [vmem:[%s5 + $0x50] sm:$0xf]
    %v2210 = vld [vmem:[%s5 + $0x54] sm:$0xf]
    %v2211 = vld [vmem:[%s5 + $0x58] sm:$0xf]
    %v2212 = vld [vmem:[%s5 + $0x5c] sm:$0xf]
    %v2213 = vld [vmem:[%s5 + $0x60] sm:$0xf]
    %v2214 = vld [vmem:[%s5 + $0x64] sm:$0xf]
    %v2215 = vld [vmem:[%s5 + $0x68] sm:$0xf]
    %v2216 = vld [vmem:[%s5 + $0x6c] sm:$0xf]
    %v2217 = vld [vmem:[%s5 + $0x70] sm:$0xf]
    %v2218 = vld [vmem:[%s5 + $0x74] sm:$0xf]
    %v2219 = vld [vmem:[%s5 + $0x78] sm:$0xf]
    %v2220 = vld [vmem:[%s5 + $0x7c] sm:$0xf]
    %v2221 = vld [vmem:[#allocation10] sm:$0x1]
    %v2223 = vlaneseq
    %v2224 = vshrl.u32 %v2223, 7
    %v2225 = vsub.s32 0, %v2224
    %v2226 = vrot.slane %v2221, %v2225
    %v2260 = vunpack.c.l.b16 %v2189
    %v2261 = vunpack.c.l.b16 %v2190
    %v2262 = vunpack.c.l.b16 %v2191
    %v2263 = vunpack.c.l.b16 %v2192
    %v2264 = vunpack.c.l.b16 %v2193
    %v2265 = vunpack.c.l.b16 %v2194
    %v2266 = vunpack.c.l.b16 %v2195
    %v2267 = vunpack.c.l.b16 %v2196
    %v2268 = vunpack.c.l.b16 %v2197
    %v2269 = vunpack.c.l.b16 %v2198
    %v2270 = vunpack.c.l.b16 %v2199
    %v2271 = vunpack.c.l.b16 %v2200
    %v2272 = vunpack.c.l.b16 %v2201
    %v2273 = vunpack.c.l.b16 %v2202
    %v2274 = vunpack.c.l.b16 %v2203
    %v2275 = vunpack.c.l.b16 %v2204
    %v2276 = vunpack.c.l.b16 %v2205
    %v2277 = vunpack.c.l.b16 %v2206
    %v2278 = vunpack.c.l.b16 %v2207
    %v2279 = vunpack.c.l.b16 %v2208
    %v2280 = vunpack.c.l.b16 %v2209
    %v2281 = vunpack.c.l.b16 %v2210
    %v2282 = vunpack.c.l.b16 %v2211
    %v2283 = vunpack.c.l.b16 %v2212
    %v2284 = vunpack.c.l.b16 %v2213
    %v2285 = vunpack.c.l.b16 %v2214
    %v2286 = vunpack.c.l.b16 %v2215
    %v2287 = vunpack.c.l.b16 %v2216
    %v2288 = vunpack.c.l.b16 %v2217
    %v2289 = vunpack.c.l.b16 %v2218
    %v2290 = vunpack.c.l.b16 %v2219
    %v2291 = vunpack.c.l.b16 %v2220
    %v2292 = vpack.c.b16 %v2261, %v2260
    %v2293 = vpack.c.b16 %v2263, %v2262
    %v2294 = vpack.c.b16 %v2265, %v2264
    %v2295 = vpack.c.b16 %v2267, %v2266
    %v2296 = vpack.c.b16 %v2269, %v2268
    %v2297 = vpack.c.b16 %v2271, %v2270
    %v2298 = vpack.c.b16 %v2273, %v2272
    %v2299 = vpack.c.b16 %v2275, %v2274
    %v2300 = vpack.c.b16 %v2277, %v2276
    %v2301 = vpack.c.b16 %v2279, %v2278
    %v2302 = vpack.c.b16 %v2281, %v2280
    %v2303 = vpack.c.b16 %v2283, %v2282
    %v2304 = vpack.c.b16 %v2285, %v2284
    %v2305 = vpack.c.b16 %v2287, %v2286
    %v2306 = vpack.c.b16 %v2289, %v2288
    %v2307 = vpack.c.b16 %v2291, %v2290
    %2324 = vmatprep.subr.bf16.mxu0 0
    %2325 = vmatpush1.bf16.msra.mxu0 %v2292
    %2326 = vmatprep.subr.bf16.mxu0 0
    %2327 = vmatpush1.bf16.msra.mxu0 %v2293
    %2328 = vmatprep.subr.bf16.mxu0 0
    %2329 = vmatpush1.bf16.msra.mxu0 %v2294
    %2330 = vmatprep.subr.bf16.mxu0 0
    %2331 = vmatpush1.bf16.msra.mxu0 %v2295
    %2332 = vmatprep.subr.bf16.mxu0 0
    %2333 = vmatpush1.bf16.msra.mxu0 %v2296
    %2334 = vmatprep.subr.bf16.mxu0 0
    %2335 = vmatpush1.bf16.msra.mxu0 %v2297
    %2336 = vmatprep.subr.bf16.mxu0 0
    %2337 = vmatpush1.bf16.msra.mxu0 %v2298
    %2338 = vmatprep.subr.bf16.mxu0 0
    %2339 = vmatpush1.bf16.msra.mxu0 %v2299
    %2340 = vmatprep.subr.bf16.mxu0 0
    %2341 = vmatpush1.bf16.msra.mxu0 %v2300
    %2342 = vmatprep.subr.bf16.mxu0 0
    %2343 = vmatpush1.bf16.msra.mxu0 %v2301
    %2344 = vmatprep.subr.bf16.mxu0 0
    %2345 = vmatpush1.bf16.msra.mxu0 %v2302
    %2346 = vmatprep.subr.bf16.mxu0 0
    %2347 = vmatpush1.bf16.msra.mxu0 %v2303
    %2348 = vmatprep.subr.bf16.mxu0 0
    %2349 = vmatpush1.bf16.msra.mxu0 %v2304
    %2350 = vmatprep.subr.bf16.mxu0 0
    %2351 = vmatpush1.bf16.msra.mxu0 %v2305
    %2352 = vmatprep.subr.bf16.mxu0 0
    %2353 = vmatpush1.bf16.msra.mxu0 %v2306
    %2354 = vmatprep.subr.bf16.mxu0 0
    %2355 = vmatpush1.bf16.msra.mxu0 %v2307
    %2356 = vmatprep.mubr.bf16.mxu0 %v2188
    %2357 = vmatmul.mubr.bf16.gmra.mrb[0].mxu0 %v2187
    %v2358 = vpop.f32.mrb[0].mxu0
    %v2359 = vadd.f32 %v2226, %v2358
    %v2360 = vpop.f32.mrb[0].mxu0
    %v2361 = vpop.f32.mrb[0].mxu0
    %v2362 = vadd.f32 %v2226, %v2361
    %v2363 = vpop.f32.mrb[0].mxu0
    %2364 = vdwg.mxu0
    %v2365 = vmax.f32 %v2359, 0.0
    %v2366 = vmax.f32 %v2362, 0.0
    %v2367 = vpack.c.bf16 %v2366, %v2365
    %v2368 = vld [vmem:[%s7] sm:$0xf]
    %v2369 = vld [vmem:[%s7 + $0x4] sm:$0xf]
    %v2370 = vld [vmem:[%s7 + $0x8] sm:$0xf]
    %v2371 = vld [vmem:[%s7 + $0xc] sm:$0xf]
    %v2372 = vld [vmem:[%s7 + $0x10] sm:$0xf]
    %v2373 = vld [vmem:[%s7 + $0x14] sm:$0xf]
    %v2374 = vld [vmem:[%s7 + $0x18] sm:$0xf]
    %v2375 = vld [vmem:[%s7 + $0x1c] sm:$0xf]
    %v2376 = vld [vmem:[%s7 + $0x20] sm:$0xf]
    %v2377 = vld [vmem:[%s7 + $0x24] sm:$0xf]
    %v2378 = vld [vmem:[%s7 + $0x28] sm:$0xf]
    %v2379 = vld [vmem:[%s7 + $0x2c] sm:$0xf]
    %v2380 = vld [vmem:[%s7 + $0x30] sm:$0xf]
    %v2381 = vld [vmem:[%s7 + $0x34] sm:$0xf]
    %v2382 = vld [vmem:[%s7 + $0x38] sm:$0xf]
    %v2383 = vld [vmem:[%s7 + $0x3c] sm:$0xf]
    %v2384 = vld [vmem:[#allocation11] sm:$0x1]
    %v2386 = vlaneseq
    %v2387 = vshrl.u32 %v2386, 7
    %v2388 = vsub.s32 0, %v2387
    %v2389 = vrot.slane %v2384, %v2388
    %v2407 = vunpack.c.l.b16 %v2368
    %v2408 = vunpack.c.l.b16 %v2369
    %v2409 = vunpack.c.l.b16 %v2370
    %v2410 = vunpack.c.l.b16 %v2371
    %v2411 = vunpack.c.l.b16 %v2372
    %v2412 = vunpack.c.l.b16 %v2373
    %v2413 = vunpack.c.l.b16 %v2374
    %v2414 = vunpack.c.l.b16 %v2375
    %v2415 = vunpack.c.l.b16 %v2376
    %v2416 = vunpack.c.l.b16 %v2377
    %v2417 = vunpack.c.l.b16 %v2378
    %v2418 = vunpack.c.l.b16 %v2379
    %v2419 = vunpack.c.l.b16 %v2380
    %v2420 = vunpack.c.l.b16 %v2381
    %v2421 = vunpack.c.l.b16 %v2382
    %v2422 = vunpack.c.l.b16 %v2383
    %v2423 = vpack.c.b16 %v2408, %v2407
    %v2424 = vpack.c.b16 %v2410, %v2409
    %v2425 = vpack.c.b16 %v2412, %v2411
    %v2426 = vpack.c.b16 %v2414, %v2413
    %v2427 = vpack.c.b16 %v2416, %v2415
    %v2428 = vpack.c.b16 %v2418, %v2417
    %v2429 = vpack.c.b16 %v2420, %v2419
    %v2430 = vpack.c.b16 %v2422, %v2421
    %2439 = vmatprep.subr.bf16.mxu0 0
    %2440 = vmatpush1.bf16.msra.mxu0 %v2423
    %2441 = vmatprep.subr.bf16.mxu0 0
    %2442 = vmatpush1.bf16.msra.mxu0 %v2424
    %2443 = vmatprep.subr.bf16.mxu0 0
    %2444 = vmatpush1.bf16.msra.mxu0 %v2425
    %2445 = vmatprep.subr.bf16.mxu0 0
    %2446 = vmatpush1.bf16.msra.mxu0 %v2426
    %2447 = vmatprep.subr.bf16.mxu0 0
    %2448 = vmatpush1.bf16.msra.mxu0 %v2427
    %2449 = vmatprep.subr.bf16.mxu0 0
    %2450 = vmatpush1.bf16.msra.mxu0 %v2428
    %2451 = vmatprep.subr.bf16.mxu0 0
    %2452 = vmatpush1.bf16.msra.mxu0 %v2429
    %2453 = vmatprep.subr.bf16.mxu0 0
    %2454 = vmatpush1.bf16.msra.mxu0 %v2430
    %2455 = vmatprep.subr.bf16.mxu0 0
    %2456 = vmatpush1.bf16.msra.mxu0 0
    %2457 = vmatprep.subr.bf16.mxu0 0
    %2458 = vmatpush1.bf16.msra.mxu0 0
    %2459 = vmatprep.subr.bf16.mxu0 0
    %2460 = vmatpush1.bf16.msra.mxu0 0
    %2461 = vmatprep.subr.bf16.mxu0 0
    %2462 = vmatpush1.bf16.msra.mxu0 0
    %2463 = vmatprep.subr.bf16.mxu0 0
    %2464 = vmatpush1.bf16.msra.mxu0 0
    %2465 = vmatprep.subr.bf16.mxu0 0
    %2466 = vmatpush1.bf16.msra.mxu0 0
    %2467 = vmatprep.subr.bf16.mxu0 0
    %2468 = vmatpush1.bf16.msra.mxu0 0
    %2469 = vmatprep.subr.bf16.mxu0 0
    %2470 = vmatpush1.bf16.msra.mxu0 0
    %2471 = vmatprep.mubr.bf16.mxu0 0
    %2472 = vmatmul.mubr.bf16.gmra.mrb[0].mxu0 %v2367
    %v2473 = vpop.f32.mrb[0].mxu0
    %v2474 = vadd.f32 %v2389, %v2473
    %v2475 = vpop.f32.mrb[0].mxu0
    %v2476 = vpop.f32.mrb[0].mxu0
    %v2477 = vadd.f32 %v2389, %v2476
    %v2478 = vpop.f32.mrb[0].mxu0
    %2479 = vdwg.mxu0
    %v2480 = vmax.f32 %v2474, 0.0
    %v2481 = vmax.f32 %v2477, 0.0
    %v2482 = vpack.c.bf16 %v2481, %v2480
    %v2483 = vld [vmem:[%s9] sm:$0xf]
    %v2484 = vld [vmem:[%s9 + $0x4] sm:$0xf]
    %v2485 = vld [vmem:[%s9 + $0x8] sm:$0xf]
    %v2486 = vld [vmem:[%s9 + $0xc] sm:$0xf]
    %v2487 = vld [vmem:[%s9 + $0x10] sm:$0xf]
    %v2488 = vld [vmem:[%s9 + $0x14] sm:$0xf]
    %v2489 = vld [vmem:[%s9 + $0x18] sm:$0xf]
    %v2490 = vld [vmem:[%s9 + $0x1c] sm:$0xf]
    %v2491 = vld [vmem:[%s10] sm:$0x1]
    %v2493 = vlaneseq
    %v2494 = vshrl.u32 %v2493, 7
    %v2495 = vsub.s32 0, %v2494
    %v2496 = vrot.slane %v2491, %v2495
    %v2506 = vunpack.c.l.b16 %v2483
    %v2507 = vunpack.c.l.b16 %v2484
    %v2508 = vunpack.c.l.b16 %v2485
    %v2509 = vunpack.c.l.b16 %v2486
    %v2510 = vunpack.c.l.b16 %v2487
    %v2511 = vunpack.c.l.b16 %v2488
    %v2512 = vunpack.c.l.b16 %v2489
    %v2513 = vunpack.c.l.b16 %v2490
    %v2514 = vpack.c.b16 %v2507, %v2506
    %v2515 = vpack.c.b16 %v2509, %v2508
    %v2516 = vpack.c.b16 %v2511, %v2510
    %v2517 = vpack.c.b16 %v2513, %v2512
    %vm2522 = vcmask 523264
    %v2524 = vsel %vm2522, %v2482, 0
    %2526 = vmatprep.subr.bf16.mxu0 0
    %2527 = vmatpush1.bf16.msra.mxu0 %v2514
    %2528 = vmatprep.subr.bf16.mxu0 0
    %2529 = vmatpush1.bf16.msra.mxu0 %v2515
    %2530 = vmatprep.subr.bf16.mxu0 0
    %2531 = vmatpush1.bf16.msra.mxu0 %v2516
    %2532 = vmatprep.subr.bf16.mxu0 0
    %2533 = vmatpush1.bf16.msra.mxu0 %v2517
    %2534 = vmatprep.subr.bf16.mxu0 0
    %2535 = vmatpush1.bf16.msra.mxu0 0
    %2536 = vmatprep.subr.bf16.mxu0 0
    %2537 = vmatpush1.bf16.msra.mxu0 0
    %2538 = vmatprep.subr.bf16.mxu0 0
    %2539 = vmatpush1.bf16.msra.mxu0 0
    %2540 = vmatprep.subr.bf16.mxu0 0
    %2541 = vmatpush1.bf16.msra.mxu0 0
    %2542 = vmatprep.subr.bf16.mxu0 0
    %2543 = vmatpush1.bf16.msra.mxu0 0
    %2544 = vmatprep.subr.bf16.mxu0 0
    %2545 = vmatpush1.bf16.msra.mxu0 0
    %2546 = vmatprep.subr.bf16.mxu0 0
    %2547 = vmatpush1.bf16.msra.mxu0 0
    %2548 = vmatprep.subr.bf16.mxu0 0
    %2549 = vmatpush1.bf16.msra.mxu0 0
    %2550 = vmatprep.subr.bf16.mxu0 0
    %2551 = vmatpush1.bf16.msra.mxu0 0
    %2552 = vmatprep.subr.bf16.mxu0 0
    %2553 = vmatpush1.bf16.msra.mxu0 0
    %2554 = vmatprep.subr.bf16.mxu0 0
    %2555 = vmatpush1.bf16.msra.mxu0 0
    %2556 = vmatprep.subr.bf16.mxu0 0
    %2557 = vmatpush1.bf16.msra.mxu0 0
    %2558 = vmatprep.mubr.bf16.mxu0 0
    %2559 = vmatmul.mubr.bf16.gmra.mrb[0].mxu0 %v2524
    %v2560 = vpop.f32.mrb[0].mxu0
    %v2561 = vadd.f32 %v2496, %v2560
    %v2562 = vpop.f32.mrb[0].mxu0
    %v2563 = vpop.f32.mrb[0].mxu0
    %v2564 = vadd.f32 %v2496, %v2563
    %v2565 = vpop.f32.mrb[0].mxu0
    %2566 = vdwg.mxu0
    %v2567 = vmax.f32 %v2561, 0.0
    %v2568 = vmax.f32 %v2564, 0.0
    %v2569 = vpack.c.bf16 %v2568, %v2567
    %v2570 = vld [vmem:[%s11] sm:$0xf]
    %v2571 = vld [vmem:[%s11 + $0x4] sm:$0xf]
    %v2572 = vld [vmem:[%s11 + $0x8] sm:$0xf]
    %v2573 = vld [vmem:[%s11 + $0xc] sm:$0xf]
    %v2574 = vld [vmem:[%s12] sm:$0x1]
    %v2576 = vlaneseq
    %v2577 = vshrl.u32 %v2576, 7
    %v2578 = vsub.s32 0, %v2577
    %v2579 = vrot.slane %v2574, %v2578
    %v2585 = vunpack.c.l.b16 %v2570
    %v2586 = vunpack.c.l.b16 %v2571
    %v2587 = vunpack.c.l.b16 %v2572
    %v2588 = vunpack.c.l.b16 %v2573
    %v2589 = vpack.c.b16 %v2586, %v2585
    %v2590 = vpack.c.b16 %v2588, %v2587
    %vm2593 = vcmask 261120
    %v2595 = vsel %vm2593, %v2569, 0
    %2597 = vmatprep.subr.bf16.mxu0 0
    %2598 = vmatpush1.bf16.msra.mxu0 %v2589
    %2599 = vmatprep.subr.bf16.mxu0 0
    %2600 = vmatpush1.bf16.msra.mxu0 %v2590
    %2601 = vmatprep.subr.bf16.mxu0 0
    %2602 = vmatpush1.bf16.msra.mxu0 0
    %2603 = vmatprep.subr.bf16.mxu0 0
    %2604 = vmatpush1.bf16.msra.mxu0 0
    %2605 = vmatprep.subr.bf16.mxu0 0
    %2606 = vmatpush1.bf16.msra.mxu0 0
    %2607 = vmatprep.subr.bf16.mxu0 0
    %2608 = vmatpush1.bf16.msra.mxu0 0
    %2609 = vmatprep.subr.bf16.mxu0 0
    %2610 = vmatpush1.bf16.msra.mxu0 0
    %2611 = vmatprep.subr.bf16.mxu0 0
    %2612 = vmatpush1.bf16.msra.mxu0 0
    %2613 = vmatprep.subr.bf16.mxu0 0
    %2614 = vmatpush1.bf16.msra.mxu0 0
    %2615 = vmatprep.subr.bf16.mxu0 0
    %2616 = vmatpush1.bf16.msra.mxu0 0
    %2617 = vmatprep.subr.bf16.mxu0 0
    %2618 = vmatpush1.bf16.msra.mxu0 0
    %2619 = vmatprep.subr.bf16.mxu0 0
    %2620 = vmatpush1.bf16.msra.mxu0 0
    %2621 = vmatprep.subr.bf16.mxu0 0
    %2622 = vmatpush1.bf16.msra.mxu0 0
    %2623 = vmatprep.subr.bf16.mxu0 0
    %2624 = vmatpush1.bf16.msra.mxu0 0
    %2625 = vmatprep.subr.bf16.mxu0 0
    %2626 = vmatpush1.bf16.msra.mxu0 0
    %2627 = vmatprep.subr.bf16.mxu0 0
    %2628 = vmatpush1.bf16.msra.mxu0 0
    %2629 = vmatprep.mubr.bf16.mxu0 0
    %2630 = vmatmul.mubr.bf16.gmra.mrb[0].mxu0 %v2595
    %v2631 = vpop.f32.mrb[0].mxu0
    %v2632 = vadd.f32 %v2579, %v2631
    %v2633 = vpop.f32.mrb[0].mxu0
    %v2634 = vpop.f32.mrb[0].mxu0
    %v2635 = vadd.f32 %v2579, %v2634
    %v2636 = vpop.f32.mrb[0].mxu0
    %2637 = vdwg.mxu0
    %v2638 = vpack.c.bf16 %v2635, %v2632
    %v2640 = vunpack.c.l.b16 %v2638
    %v2641 = vunpack.c.h.b16 %v2638
    %v2642 = vpack.c.b16 %v2640, %v2640
    %v2643 = vpack.c.b16 %v2641, %v2641
    %2646 = vst [vmem:[#allocation13] sm:$0xf] %v2642
    %2647 = vst [vmem:[#allocation13 + $0x4] sm:$0xf] %v2643
    // Predicated region
    $region78: #{tpu_custom_call.1} parent=1 // pred_check
      _
    $region79: #{tpu_custom_call.1} parent=1 // pred_check_branch
      %2649 = sbr.rel (0) target = $region81
    $region80: #{tpu_custom_call.1} parent=1 // pred_region
      %s2651 = ssub.s32 128, 128
      %2652 = vsyncadd [#allocation4], %s2651
      %s2653 = sshll.u32 [#allocation13], 4
      %s2654 = int_to_ptr.vmem [resolvable:$true] %s2653
      %2659 = dma.vmem_to_hbm [thread:$0]  %s2654, 128, %s13, [#allocation4], 64, 64, 4
    $region81: #{tpu_custom_call.1} parent=1 // pred_fallthru
      _
    // Predicated region
    $region82: #{tpu_custom_call.1} parent=1 // pred_check
      _
    $region83: #{tpu_custom_call.1} parent=1 // pred_check_branch
      %2661 = sbr.rel (0) target = $region85
    $region84: #{tpu_custom_call.1} parent=1 // pred_region
      %2662 = dma.done [#allocation4], 128
    $region85: #{tpu_custom_call.1} parent=1 // pred_fallthru
      _
    %2663 = vsyncpa [#allocation3], 1
    %2664 = vsyncpa [#allocation6], 1
    %2665 = vsyncpa [#allocation9], 1
    %2666 = vsyncpa [#allocation12], 1
    %2667 = vsyncpa [#allocation4], 1

</llo_original>
